<compile_context>
chip_gen: v7x
topology: tpu7x:2x2x1
jax: 0.10.0
libtpu: 0.0.40
codegen_flags: <defaults>
</compile_context>

<pallas_src>
import numpy as np
import jax
import jax.numpy as jnp
from jax import lax
from jax.experimental import pallas as pl
from jax.experimental.pallas import tpu as pltpu


# ----------------------------- Pallas kernel ------------------------------- #

def _encoder_kernel(x_ref, m1_ref, m2_ref, m3_ref, m4_ref, n5_ref,
                    w1_ref, w2_ref, w3_ref, w4_ref, w5_ref, o_ref):
    """Fully fused 5-layer encoder for one batch tile (samples stacked on rows).

    x_ref : (R0, Cin)            activations: batch*length on rows, channels on lanes
    mk_ref: (3, R_k, R_{k-1})    tap constants  Shift_t @ AvgPool  (block-diag over batch)
    n5_ref: (2, Rout, R_4)       final-conv tap constants  Select_t @ AvgPool
    wk_ref: (3*C_{k-1}, C_k)     conv-k weights, taps concatenated on the contraction dim
    w5_ref: (2*C_4, E)           final conv weights
    o_ref : (Rout, E)
    """

    def conv_lrelu(a, m_ref, w_ref):
        # Three tap inputs via resident constants (independent MXU pushes) ...
        t0 = jnp.dot(m_ref[0], a, preferred_element_type=jnp.float32)
        t1 = jnp.dot(m_ref[1], a, preferred_element_type=jnp.float32)
        t2 = jnp.dot(m_ref[2], a, preferred_element_type=jnp.float32)
        # ... lane-concat (3*C <= 96, fits one vreg width) and ONE weight matmul.
        slab = jnp.concatenate([t0, t1, t2], axis=-1)
        z = jnp.dot(slab, w_ref[...], preferred_element_type=jnp.float32)
        return jnp.where(z > 0, z, 0.2 * z)                       # LeakyReLU(0.2)

    a = x_ref[...]
    a = conv_lrelu(a, m1_ref, w1_ref)
    a = conv_lrelu(a, m2_ref, w2_ref)
    a = conv_lrelu(a, m3_ref, w3_ref)
    a = conv_lrelu(a, m4_ref, w4_ref)

    # Final Conv1d(k=2, stride=1, pad=0); the last AvgPool is folded into n5.
    u0 = jnp.dot(n5_ref[0], a, preferred_element_type=jnp.float32)
    u1 = jnp.dot(n5_ref[1], a, preferred_element_type=jnp.float32)
    slab = jnp.concatenate([u0, u1], axis=-1)
    o_ref[...] = jnp.dot(slab, w5_ref[...], preferred_element_type=jnp.float32)


# ----------------------- constant / weight preparation --------------------- #

def _shift_mat(n, off):
    """(S @ h)[i] = h[i + off], zero outside [0, n)."""
    m = np.zeros((n, n), np.float32)
    for i in range(n):
        j = i + off
        if 0 <= j < n:
            m[i, j] = 1.0
    return m


def _pool_mat(n):
    """AvgPool1d(2): (P @ h)[j] = 0.5 * (h[2j] + h[2j+1])."""
    m = np.zeros((n // 2, n), np.float32)
    for j in range(n // 2):
        m[j, 2 * j] = 0.5
        m[j, 2 * j + 1] = 0.5
    return m


def _select_mat(n_out, n_in, off):
    """(T @ h)[i] = h[i + off], valid (no padding)."""
    m = np.zeros((n_out, n_in), np.float32)
    for i in range(n_out):
        m[i, i + off] = 1.0
    return m


def prepare_encoder(params, L, batch_tile):
    """One-time preparation of weights and resident shift/pool constants.

    params     : PyTorch-layout weights (Cout, Cin, K) for conv1..conv5.
    L          : input length (must be a multiple of 16 with L//16 >= 2).
    batch_tile : samples processed per grid step (whole batch for small B).
    """
    assert L % 16 == 0 and L // 16 >= 2, (
        "Encoder needs L % 16 == 0 and L//16 >= 2 (4x AvgPool(2) then Conv1d(k=2)).")

    # Weights (Cout, Cin, K) -> (K*Cin, Cout): taps stacked on the contraction dim,
    # matching the lane-concatenated tap slab built in the kernel.
    def wcat(w):
        w = np.asarray(w)
        cout, cin, k = w.shape
        return jnp.asarray(np.transpose(w, (2, 1, 0)).reshape(k * cin, cout))

    w1c, w2c, w3c, w4c, w5c = (wcat(w) for w in params)

    # Block-diagonal over the batch tile so per-sample conv padding stays correct.
    def bdiag(m):
        return np.kron(np.eye(batch_tile, dtype=np.float32), m).astype(np.float32)

    Ls = [L, L // 2, L // 4, L // 8, L // 16]
    m1 = np.stack([bdiag(_shift_mat(Ls[0], t - 1)) for t in range(3)])
    m2 = np.stack([bdiag(_shift_mat(Ls[1], t - 1) @ _pool_mat(Ls[0])) for t in range(3)])
    m3 = np.stack([bdiag(_shift_mat(Ls[2], t - 1) @ _pool_mat(Ls[1])) for t in range(3)])
    m4 = np.stack([bdiag(_shift_mat(Ls[3], t - 1) @ _pool_mat(Ls[2])) for t in range(3)])
    lout = Ls[4] - 1
    n5 = np.stack([bdiag(_select_mat(lout, Ls[4], t) @ _pool_mat(Ls[3])) for t in range(2)])

    consts = tuple(jnp.asarray(c) for c in (m1, m2, m3, m4, n5))
    return consts + (w1c, w2c, w3c, w4c, w5c)


# ------------------------------ JAX wrapper -------------------------------- #

@jax.jit
def encoder_forward(x, prepared):
    """x: (B, Cin, L) NCL, PyTorch-identical. Returns (B, embed_dim, L//16 - 1)."""
    m1, m2, m3, m4, n5, w1c, w2c, w3c, w4c, w5c = prepared
    B, Cin, L = x.shape
    E = w5c.shape[1]
    Lout = L // 16 - 1
    bt = m1.shape[1] // L                 # batch tile the constants were built for
    assert B % bt == 0

    # Batch stacked on the matmul row (sublane) axis, channels on lanes.
    x_rows = jnp.transpose(x, (0, 2, 1)).reshape(B * L, Cin)

    out = pl.pallas_call(
        _encoder_kernel,
        out_shape=jax.ShapeDtypeStruct((B * Lout, E), jnp.float32),
        grid=(B // bt,),
        in_specs=[
            pl.BlockSpec((bt * L, Cin), lambda b: (b, 0)),
            pl.BlockSpec(m1.shape, lambda b: (0, 0, 0)),
            pl.BlockSpec(m2.shape, lambda b: (0, 0, 0)),
            pl.BlockSpec(m3.shape, lambda b: (0, 0, 0)),
            pl.BlockSpec(m4.shape, lambda b: (0, 0, 0)),
            pl.BlockSpec(n5.shape, lambda b: (0, 0, 0)),
            pl.BlockSpec(w1c.shape, lambda b: (0, 0)),
            pl.BlockSpec(w2c.shape, lambda b: (0, 0)),
            pl.BlockSpec(w3c.shape, lambda b: (0, 0)),
            pl.BlockSpec(w4c.shape, lambda b: (0, 0)),
            pl.BlockSpec(w5c.shape, lambda b: (0, 0)),
        ],
        out_specs=pl.BlockSpec((bt * Lout, E), lambda b: (b, 0)),
        compiler_params=pltpu.CompilerParams(dimension_semantics=("parallel",)),
    )(x_rows, m1, m2, m3, m4, n5, w1c, w2c, w3c, w4c, w5c)

    return jnp.transpose(out.reshape(B, Lout, E), (0, 2, 1))   # (B, E, Lout) NCL


# ----------------------- pure-JAX reference (check) ------------------------ #

def encoder_reference(x, params):
    w1, w2, w3, w4, w5 = params

    def conv1d(y, w, pad):
        return lax.conv_general_dilated(
            y, w, window_strides=(1,), padding=[(pad, pad)],
            dimension_numbers=("NCH", "OIH", "NCH"))

    def lrelu(y):
        return jnp.where(y > 0, y, 0.2 * y)

    def pool(y):
        b, c, l = y.shape
        return y.reshape(b, c, l // 2, 2).mean(-1)

    y = pool(lrelu(conv1d(x, w1, 1)))
    y = pool(lrelu(conv1d(y, w2, 1)))
    y = pool(lrelu(conv1d(y, w3, 1)))
    y = pool(lrelu(conv1d(y, w4, 1)))
    return conv1d(y, w5, 0)


# --------------------------------- main ------------------------------------ #

if __name__ == "__main__":
    ndfs = (8, 16, 16, 32)
    embed_dim = 32
    B, Cin, L = 2, 2, 32          # after 4x AvgPool(2): L=2, conv5(k=2) -> L=1

    key = jax.random.PRNGKey(0)
    kx, k1, k2, k3, k4, k5 = jax.random.split(key, 6)

    x = jax.random.normal(kx, (B, Cin, L), dtype=jnp.float32)

    ndf1, ndf2, ndf3, ndf4 = ndfs
    params = (
        0.1 * jax.random.normal(k1, (ndf1, Cin, 3), dtype=jnp.float32),
        0.1 * jax.random.normal(k2, (ndf2, ndf1, 3), dtype=jnp.float32),
        0.1 * jax.random.normal(k3, (ndf3, ndf2, 3), dtype=jnp.float32),
        0.1 * jax.random.normal(k4, (ndf4, ndf3, 3), dtype=jnp.float32),
        0.1 * jax.random.normal(k5, (embed_dim, ndf4, 2), dtype=jnp.float32),
    )

    prepared = prepare_encoder(params, L, batch_tile=B)   # one-time constants/weights

    out = jax.block_until_ready(encoder_forward(x, prepared))
    ref = jax.block_until_ready(encoder_reference(x, params))

    assert out.shape == (B, embed_dim, L // 16 - 1), out.shape
    assert jnp.allclose(out, ref, atol=1e-4, rtol=1e-4), \
        float(jnp.max(jnp.abs(out - ref)))

    print("KERNEL_OK")
</pallas_src>

<mosaic_0001>
module attributes {stable_mosaic.version = 11 : i64} {
  func.func @_encoder_kernel(%arg0: i32, %arg1: memref<64x2xf32, #tpu.memory_space<vmem>>, %arg2: memref<3x64x64xf32, #tpu.memory_space<vmem>>, %arg3: memref<3x32x64xf32, #tpu.memory_space<vmem>>, %arg4: memref<3x16x32xf32, #tpu.memory_space<vmem>>, %arg5: memref<3x8x16xf32, #tpu.memory_space<vmem>>, %arg6: memref<2x2x8xf32, #tpu.memory_space<vmem>>, %arg7: memref<6x8xf32, #tpu.memory_space<vmem>>, %arg8: memref<24x16xf32, #tpu.memory_space<vmem>>, %arg9: memref<48x16xf32, #tpu.memory_space<vmem>>, %arg10: memref<48x32xf32, #tpu.memory_space<vmem>>, %arg11: memref<64x32xf32, #tpu.memory_space<vmem>>, %arg12: memref<2x32xf32, #tpu.memory_space<vmem>>) attributes {dimension_semantics = [#tpu.dimension_semantics<parallel>], iteration_bounds = array<i64: 1>, scalar_prefetch = 0 : i64, scratch_operands = 0 : i64, tpu.core_type = #tpu.core_type<tc>, window_params = [{transform_indices = @transform_0, window_bounds = array<i64: 64, 2>}, {pipeline_mode = #tpu.pipeline_mode<synchronous>, transform_indices = @transform_1, window_bounds = array<i64: 3, 64, 64>}, {pipeline_mode = #tpu.pipeline_mode<synchronous>, transform_indices = @transform_2, window_bounds = array<i64: 3, 32, 64>}, {pipeline_mode = #tpu.pipeline_mode<synchronous>, transform_indices = @transform_3, window_bounds = array<i64: 3, 16, 32>}, {pipeline_mode = #tpu.pipeline_mode<synchronous>, transform_indices = @transform_4, window_bounds = array<i64: 3, 8, 16>}, {pipeline_mode = #tpu.pipeline_mode<synchronous>, transform_indices = @transform_5, window_bounds = array<i64: 2, 2, 8>}, {pipeline_mode = #tpu.pipeline_mode<synchronous>, transform_indices = @transform_6, window_bounds = array<i64: 6, 8>}, {pipeline_mode = #tpu.pipeline_mode<synchronous>, transform_indices = @transform_7, window_bounds = array<i64: 24, 16>}, {pipeline_mode = #tpu.pipeline_mode<synchronous>, transform_indices = @transform_8, window_bounds = array<i64: 48, 16>}, {pipeline_mode = #tpu.pipeline_mode<synchronous>, transform_indices = @transform_9, window_bounds = array<i64: 48, 32>}, {pipeline_mode = #tpu.pipeline_mode<synchronous>, transform_indices = @transform_10, window_bounds = array<i64: 64, 32>}, {transform_indices = @transform_11, window_bounds = array<i64: 2, 32>}]} {
    %c0 = arith.constant 0 : index
    %c0_0 = arith.constant 0 : index
    %0 = vector.load %arg1[%c0, %c0_0] : memref<64x2xf32, #tpu.memory_space<vmem>>, vector<64x2xf32>
    %c0_1 = arith.constant 0 : index
    %c0_2 = arith.constant 0 : index
    %c0_3 = arith.constant 0 : index
    %1 = vector.load %arg2[%c0_1, %c0_2, %c0_3] : memref<3x64x64xf32, #tpu.memory_space<vmem>>, vector<1x64x64xf32>
    %2 = vector.shape_cast %1 : vector<1x64x64xf32> to vector<64x64xf32>
    %cst = arith.constant dense<0.000000e+00> : vector<64x2xf32>
    %3 = tpu.matmul %2, %0, %cst {dimension_numbers = #tpu.dot_dimension_numbers<[1], [0], [0], [1], [0, 0, 1, 1], [], []>} : vector<64x64xf32>, vector<64x2xf32>, vector<64x2xf32> -> vector<64x2xf32>
    %c1 = arith.constant 1 : index
    %c0_4 = arith.constant 0 : index
    %c0_5 = arith.constant 0 : index
    %4 = vector.load %arg2[%c1, %c0_4, %c0_5] : memref<3x64x64xf32, #tpu.memory_space<vmem>>, vector<1x64x64xf32>
    %5 = vector.shape_cast %4 : vector<1x64x64xf32> to vector<64x64xf32>
    %cst_6 = arith.constant dense<0.000000e+00> : vector<64x2xf32>
    %6 = tpu.matmul %5, %0, %cst_6 {dimension_numbers = #tpu.dot_dimension_numbers<[1], [0], [0], [1], [0, 0, 1, 1], [], []>} : vector<64x64xf32>, vector<64x2xf32>, vector<64x2xf32> -> vector<64x2xf32>
    %c2 = arith.constant 2 : index
    %c0_7 = arith.constant 0 : index
    %c0_8 = arith.constant 0 : index
    %7 = vector.load %arg2[%c2, %c0_7, %c0_8] : memref<3x64x64xf32, #tpu.memory_space<vmem>>, vector<1x64x64xf32>
    %8 = vector.shape_cast %7 : vector<1x64x64xf32> to vector<64x64xf32>
    %cst_9 = arith.constant dense<0.000000e+00> : vector<64x2xf32>
    %9 = tpu.matmul %8, %0, %cst_9 {dimension_numbers = #tpu.dot_dimension_numbers<[1], [0], [0], [1], [0, 0, 1, 1], [], []>} : vector<64x64xf32>, vector<64x2xf32>, vector<64x2xf32> -> vector<64x2xf32>
    %10 = tpu.concatenate %3, %6, %9 in 1 : vector<64x2xf32>, vector<64x2xf32>, vector<64x2xf32> -> vector<64x6xf32>
    %c0_10 = arith.constant 0 : index
    %c0_11 = arith.constant 0 : index
    %11 = vector.load %arg7[%c0_10, %c0_11] : memref<6x8xf32, #tpu.memory_space<vmem>>, vector<6x8xf32>
    %cst_12 = arith.constant dense<0.000000e+00> : vector<64x8xf32>
    %12 = tpu.matmul %10, %11, %cst_12 {dimension_numbers = #tpu.dot_dimension_numbers<[1], [0], [0], [1], [0, 0, 1, 1], [], []>} : vector<64x6xf32>, vector<6x8xf32>, vector<64x8xf32> -> vector<64x8xf32>
    %cst_13 = arith.constant 0.000000e+00 : f32
    %13 = vector.broadcast %cst_13 : f32 to vector<64x8xf32>
    %14 = arith.cmpf ogt, %12, %13 : vector<64x8xf32>
    %cst_14 = arith.constant 2.000000e-01 : f32
    %15 = vector.broadcast %cst_14 : f32 to vector<64x8xf32>
    %16 = arith.mulf %15, %12 : vector<64x8xf32>
    %17 = arith.select %14, %12, %16 : vector<64x8xi1>, vector<64x8xf32>
    %c0_15 = arith.constant 0 : index
    %c0_16 = arith.constant 0 : index
    %c0_17 = arith.constant 0 : index
    %18 = vector.load %arg3[%c0_15, %c0_16, %c0_17] : memref<3x32x64xf32, #tpu.memory_space<vmem>>, vector<1x32x64xf32>
    %19 = vector.shape_cast %18 : vector<1x32x64xf32> to vector<32x64xf32>
    %cst_18 = arith.constant dense<0.000000e+00> : vector<32x8xf32>
    %20 = tpu.matmul %19, %17, %cst_18 {dimension_numbers = #tpu.dot_dimension_numbers<[1], [0], [0], [1], [0, 0, 1, 1], [], []>} : vector<32x64xf32>, vector<64x8xf32>, vector<32x8xf32> -> vector<32x8xf32>
    %c1_19 = arith.constant 1 : index
    %c0_20 = arith.constant 0 : index
    %c0_21 = arith.constant 0 : index
    %21 = vector.load %arg3[%c1_19, %c0_20, %c0_21] : memref<3x32x64xf32, #tpu.memory_space<vmem>>, vector<1x32x64xf32>
    %22 = vector.shape_cast %21 : vector<1x32x64xf32> to vector<32x64xf32>
    %cst_22 = arith.constant dense<0.000000e+00> : vector<32x8xf32>
    %23 = tpu.matmul %22, %17, %cst_22 {dimension_numbers = #tpu.dot_dimension_numbers<[1], [0], [0], [1], [0, 0, 1, 1], [], []>} : vector<32x64xf32>, vector<64x8xf32>, vector<32x8xf32> -> vector<32x8xf32>
    %c2_23 = arith.constant 2 : index
    %c0_24 = arith.constant 0 : index
    %c0_25 = arith.constant 0 : index
    %24 = vector.load %arg3[%c2_23, %c0_24, %c0_25] : memref<3x32x64xf32, #tpu.memory_space<vmem>>, vector<1x32x64xf32>
    %25 = vector.shape_cast %24 : vector<1x32x64xf32> to vector<32x64xf32>
    %cst_26 = arith.constant dense<0.000000e+00> : vector<32x8xf32>
    %26 = tpu.matmul %25, %17, %cst_26 {dimension_numbers = #tpu.dot_dimension_numbers<[1], [0], [0], [1], [0, 0, 1, 1], [], []>} : vector<32x64xf32>, vector<64x8xf32>, vector<32x8xf32> -> vector<32x8xf32>
    %27 = tpu.concatenate %20, %23, %26 in 1 : vector<32x8xf32>, vector<32x8xf32>, vector<32x8xf32> -> vector<32x24xf32>
    %c0_27 = arith.constant 0 : index
    %c0_28 = arith.constant 0 : index
    %28 = vector.load %arg8[%c0_27, %c0_28] : memref<24x16xf32, #tpu.memory_space<vmem>>, vector<24x16xf32>
    %cst_29 = arith.constant dense<0.000000e+00> : vector<32x16xf32>
    %29 = tpu.matmul %27, %28, %cst_29 {dimension_numbers = #tpu.dot_dimension_numbers<[1], [0], [0], [1], [0, 0, 1, 1], [], []>} : vector<32x24xf32>, vector<24x16xf32>, vector<32x16xf32> -> vector<32x16xf32>
    %cst_30 = arith.constant 0.000000e+00 : f32
    %30 = vector.broadcast %cst_30 : f32 to vector<32x16xf32>
    %31 = arith.cmpf ogt, %29, %30 : vector<32x16xf32>
    %cst_31 = arith.constant 2.000000e-01 : f32
    %32 = vector.broadcast %cst_31 : f32 to vector<32x16xf32>
    %33 = arith.mulf %32, %29 : vector<32x16xf32>
    %34 = arith.select %31, %29, %33 : vector<32x16xi1>, vector<32x16xf32>
    %c0_32 = arith.constant 0 : index
    %c0_33 = arith.constant 0 : index
    %c0_34 = arith.constant 0 : index
    %35 = vector.load %arg4[%c0_32, %c0_33, %c0_34] : memref<3x16x32xf32, #tpu.memory_space<vmem>>, vector<1x16x32xf32>
    %36 = vector.shape_cast %35 : vector<1x16x32xf32> to vector<16x32xf32>
    %cst_35 = arith.constant dense<0.000000e+00> : vector<16x16xf32>
    %37 = tpu.matmul %36, %34, %cst_35 {dimension_numbers = #tpu.dot_dimension_numbers<[1], [0], [0], [1], [0, 0, 1, 1], [], []>} : vector<16x32xf32>, vector<32x16xf32>, vector<16x16xf32> -> vector<16x16xf32>
    %c1_36 = arith.constant 1 : index
    %c0_37 = arith.constant 0 : index
    %c0_38 = arith.constant 0 : index
    %38 = vector.load %arg4[%c1_36, %c0_37, %c0_38] : memref<3x16x32xf32, #tpu.memory_space<vmem>>, vector<1x16x32xf32>
    %39 = vector.shape_cast %38 : vector<1x16x32xf32> to vector<16x32xf32>
    %cst_39 = arith.constant dense<0.000000e+00> : vector<16x16xf32>
    %40 = tpu.matmul %39, %34, %cst_39 {dimension_numbers = #tpu.dot_dimension_numbers<[1], [0], [0], [1], [0, 0, 1, 1], [], []>} : vector<16x32xf32>, vector<32x16xf32>, vector<16x16xf32> -> vector<16x16xf32>
    %c2_40 = arith.constant 2 : index
    %c0_41 = arith.constant 0 : index
    %c0_42 = arith.constant 0 : index
    %41 = vector.load %arg4[%c2_40, %c0_41, %c0_42] : memref<3x16x32xf32, #tpu.memory_space<vmem>>, vector<1x16x32xf32>
    %42 = vector.shape_cast %41 : vector<1x16x32xf32> to vector<16x32xf32>
    %cst_43 = arith.constant dense<0.000000e+00> : vector<16x16xf32>
    %43 = tpu.matmul %42, %34, %cst_43 {dimension_numbers = #tpu.dot_dimension_numbers<[1], [0], [0], [1], [0, 0, 1, 1], [], []>} : vector<16x32xf32>, vector<32x16xf32>, vector<16x16xf32> -> vector<16x16xf32>
    %44 = tpu.concatenate %37, %40, %43 in 1 : vector<16x16xf32>, vector<16x16xf32>, vector<16x16xf32> -> vector<16x48xf32>
    %c0_44 = arith.constant 0 : index
    %c0_45 = arith.constant 0 : index
    %45 = vector.load %arg9[%c0_44, %c0_45] : memref<48x16xf32, #tpu.memory_space<vmem>>, vector<48x16xf32>
    %cst_46 = arith.constant dense<0.000000e+00> : vector<16x16xf32>
    %46 = tpu.matmul %44, %45, %cst_46 {dimension_numbers = #tpu.dot_dimension_numbers<[1], [0], [0], [1], [0, 0, 1, 1], [], []>} : vector<16x48xf32>, vector<48x16xf32>, vector<16x16xf32> -> vector<16x16xf32>
    %cst_47 = arith.constant 0.000000e+00 : f32
    %47 = vector.broadcast %cst_47 : f32 to vector<16x16xf32>
    %48 = arith.cmpf ogt, %46, %47 : vector<16x16xf32>
    %cst_48 = arith.constant 2.000000e-01 : f32
    %49 = vector.broadcast %cst_48 : f32 to vector<16x16xf32>
    %50 = arith.mulf %49, %46 : vector<16x16xf32>
    %51 = arith.select %48, %46, %50 : vector<16x16xi1>, vector<16x16xf32>
    %c0_49 = arith.constant 0 : index
    %c0_50 = arith.constant 0 : index
    %c0_51 = arith.constant 0 : index
    %52 = vector.load %arg5[%c0_49, %c0_50, %c0_51] : memref<3x8x16xf32, #tpu.memory_space<vmem>>, vector<1x8x16xf32>
    %53 = vector.shape_cast %52 : vector<1x8x16xf32> to vector<8x16xf32>
    %cst_52 = arith.constant dense<0.000000e+00> : vector<8x16xf32>
    %54 = tpu.matmul %53, %51, %cst_52 {dimension_numbers = #tpu.dot_dimension_numbers<[1], [0], [0], [1], [0, 0, 1, 1], [], []>} : vector<8x16xf32>, vector<16x16xf32>, vector<8x16xf32> -> vector<8x16xf32>
    %c1_53 = arith.constant 1 : index
    %c0_54 = arith.constant 0 : index
    %c0_55 = arith.constant 0 : index
    %55 = vector.load %arg5[%c1_53, %c0_54, %c0_55] : memref<3x8x16xf32, #tpu.memory_space<vmem>>, vector<1x8x16xf32>
    %56 = vector.shape_cast %55 : vector<1x8x16xf32> to vector<8x16xf32>
    %cst_56 = arith.constant dense<0.000000e+00> : vector<8x16xf32>
    %57 = tpu.matmul %56, %51, %cst_56 {dimension_numbers = #tpu.dot_dimension_numbers<[1], [0], [0], [1], [0, 0, 1, 1], [], []>} : vector<8x16xf32>, vector<16x16xf32>, vector<8x16xf32> -> vector<8x16xf32>
    %c2_57 = arith.constant 2 : index
    %c0_58 = arith.constant 0 : index
    %c0_59 = arith.constant 0 : index
    %58 = vector.load %arg5[%c2_57, %c0_58, %c0_59] : memref<3x8x16xf32, #tpu.memory_space<vmem>>, vector<1x8x16xf32>
    %59 = vector.shape_cast %58 : vector<1x8x16xf32> to vector<8x16xf32>
    %cst_60 = arith.constant dense<0.000000e+00> : vector<8x16xf32>
    %60 = tpu.matmul %59, %51, %cst_60 {dimension_numbers = #tpu.dot_dimension_numbers<[1], [0], [0], [1], [0, 0, 1, 1], [], []>} : vector<8x16xf32>, vector<16x16xf32>, vector<8x16xf32> -> vector<8x16xf32>
    %61 = tpu.concatenate %54, %57, %60 in 1 : vector<8x16xf32>, vector<8x16xf32>, vector<8x16xf32> -> vector<8x48xf32>
    %c0_61 = arith.constant 0 : index
    %c0_62 = arith.constant 0 : index
    %62 = vector.load %arg10[%c0_61, %c0_62] : memref<48x32xf32, #tpu.memory_space<vmem>>, vector<48x32xf32>
    %cst_63 = arith.constant dense<0.000000e+00> : vector<8x32xf32>
    %63 = tpu.matmul %61, %62, %cst_63 {dimension_numbers = #tpu.dot_dimension_numbers<[1], [0], [0], [1], [0, 0, 1, 1], [], []>} : vector<8x48xf32>, vector<48x32xf32>, vector<8x32xf32> -> vector<8x32xf32>
    %cst_64 = arith.constant 0.000000e+00 : f32
    %64 = vector.broadcast %cst_64 : f32 to vector<8x32xf32>
    %65 = arith.cmpf ogt, %63, %64 : vector<8x32xf32>
    %cst_65 = arith.constant 2.000000e-01 : f32
    %66 = vector.broadcast %cst_65 : f32 to vector<8x32xf32>
    %67 = arith.mulf %66, %63 : vector<8x32xf32>
    %68 = arith.select %65, %63, %67 : vector<8x32xi1>, vector<8x32xf32>
    %c0_66 = arith.constant 0 : index
    %c0_67 = arith.constant 0 : index
    %c0_68 = arith.constant 0 : index
    %69 = vector.load %arg6[%c0_66, %c0_67, %c0_68] : memref<2x2x8xf32, #tpu.memory_space<vmem>>, vector<1x2x8xf32>
    %70 = vector.shape_cast %69 : vector<1x2x8xf32> to vector<2x8xf32>
    %cst_69 = arith.constant dense<0.000000e+00> : vector<2x32xf32>
    %71 = tpu.matmul %70, %68, %cst_69 {dimension_numbers = #tpu.dot_dimension_numbers<[1], [0], [0], [1], [0, 0, 1, 1], [], []>} : vector<2x8xf32>, vector<8x32xf32>, vector<2x32xf32> -> vector<2x32xf32>
    %c1_70 = arith.constant 1 : index
    %c0_71 = arith.constant 0 : index
    %c0_72 = arith.constant 0 : index
    %72 = vector.load %arg6[%c1_70, %c0_71, %c0_72] : memref<2x2x8xf32, #tpu.memory_space<vmem>>, vector<1x2x8xf32>
    %73 = vector.shape_cast %72 : vector<1x2x8xf32> to vector<2x8xf32>
    %cst_73 = arith.constant dense<0.000000e+00> : vector<2x32xf32>
    %74 = tpu.matmul %73, %68, %cst_73 {dimension_numbers = #tpu.dot_dimension_numbers<[1], [0], [0], [1], [0, 0, 1, 1], [], []>} : vector<2x8xf32>, vector<8x32xf32>, vector<2x32xf32> -> vector<2x32xf32>
    %75 = tpu.concatenate %71, %74 in 1 : vector<2x32xf32>, vector<2x32xf32> -> vector<2x64xf32>
    %c0_74 = arith.constant 0 : index
    %c0_75 = arith.constant 0 : index
    %76 = vector.load %arg11[%c0_74, %c0_75] : memref<64x32xf32, #tpu.memory_space<vmem>>, vector<64x32xf32>
    %cst_76 = arith.constant dense<0.000000e+00> : vector<2x32xf32>
    %77 = tpu.matmul %75, %76, %cst_76 {dimension_numbers = #tpu.dot_dimension_numbers<[1], [0], [0], [1], [0, 0, 1, 1], [], []>} : vector<2x64xf32>, vector<64x32xf32>, vector<2x32xf32> -> vector<2x32xf32>
    %c0_77 = arith.constant 0 : index
    %c0_78 = arith.constant 0 : index
    %78 = vector.load %arg12[%c0_77, %c0_78] : memref<2x32xf32, #tpu.memory_space<vmem>>, vector<2x32xf32>
    tpu.vector_store %arg12[%c0_77, %c0_78], %77 {strides = array<i32>} : memref<2x32xf32, #tpu.memory_space<vmem>>, vector<2x32xf32>,
    return
  }
  func.func @transform_0(%arg0: i32) -> (i32, i32) {
    %c0_i32 = arith.constant 0 : i32
    %c0_i32_0 = arith.constant 0 : i32
    return %arg0, %c0_i32 : i32, i32
  }
  func.func @transform_1(%arg0: i32) -> (i32, i32, i32) {
    %c0_i32 = arith.constant 0 : i32
    %c0_i32_0 = arith.constant 0 : i32
    %c0_i32_1 = arith.constant 0 : i32
    %c0_i32_2 = arith.constant 0 : i32
    return %c0_i32, %c0_i32_0, %c0_i32_1 : i32, i32, i32
  }
  func.func @transform_2(%arg0: i32) -> (i32, i32, i32) {
    %c0_i32 = arith.constant 0 : i32
    %c0_i32_0 = arith.constant 0 : i32
    %c0_i32_1 = arith.constant 0 : i32
    %c0_i32_2 = arith.constant 0 : i32
    return %c0_i32, %c0_i32_0, %c0_i32_1 : i32, i32, i32
  }
  func.func @transform_3(%arg0: i32) -> (i32, i32, i32) {
    %c0_i32 = arith.constant 0 : i32
    %c0_i32_0 = arith.constant 0 : i32
    %c0_i32_1 = arith.constant 0 : i32
    %c0_i32_2 = arith.constant 0 : i32
    return %c0_i32, %c0_i32_0, %c0_i32_1 : i32, i32, i32
  }
  func.func @transform_4(%arg0: i32) -> (i32, i32, i32) {
    %c0_i32 = arith.constant 0 : i32
    %c0_i32_0 = arith.constant 0 : i32
    %c0_i32_1 = arith.constant 0 : i32
    %c0_i32_2 = arith.constant 0 : i32
    return %c0_i32, %c0_i32_0, %c0_i32_1 : i32, i32, i32
  }
  func.func @transform_5(%arg0: i32) -> (i32, i32, i32) {
    %c0_i32 = arith.constant 0 : i32
    %c0_i32_0 = arith.constant 0 : i32
    %c0_i32_1 = arith.constant 0 : i32
    %c0_i32_2 = arith.constant 0 : i32
    return %c0_i32, %c0_i32_0, %c0_i32_1 : i32, i32, i32
  }
  func.func @transform_6(%arg0: i32) -> (i32, i32) {
    %c0_i32 = arith.constant 0 : i32
    %c0_i32_0 = arith.constant 0 : i32
    %c0_i32_1 = arith.constant 0 : i32
    return %c0_i32, %c0_i32_0 : i32, i32
  }
  func.func @transform_7(%arg0: i32) -> (i32, i32) {
    %c0_i32 = arith.constant 0 : i32
    %c0_i32_0 = arith.constant 0 : i32
    %c0_i32_1 = arith.constant 0 : i32
    return %c0_i32, %c0_i32_0 : i32, i32
  }
  func.func @transform_8(%arg0: i32) -> (i32, i32) {
    %c0_i32 = arith.constant 0 : i32
    %c0_i32_0 = arith.constant 0 : i32
    %c0_i32_1 = arith.constant 0 : i32
    return %c0_i32, %c0_i32_0 : i32, i32
  }
  func.func @transform_9(%arg0: i32) -> (i32, i32) {
    %c0_i32 = arith.constant 0 : i32
    %c0_i32_0 = arith.constant 0 : i32
    %c0_i32_1 = arith.constant 0 : i32
    return %c0_i32, %c0_i32_0 : i32, i32
  }
  func.func @transform_10(%arg0: i32) -> (i32, i32) {
    %c0_i32 = arith.constant 0 : i32
    %c0_i32_0 = arith.constant 0 : i32
    %c0_i32_1 = arith.constant 0 : i32
    return %c0_i32, %c0_i32_0 : i32, i32
  }
  func.func @transform_11(%arg0: i32) -> (i32, i32) {
    %c0_i32 = arith.constant 0 : i32
    %c0_i32_0 = arith.constant 0 : i32
    return %arg0, %c0_i32 : i32, i32
  }
}

</mosaic_0001>

<llo_original>
// kernel: encoder_forward.1
$region0: #{encoder_forward.1}
  #allocation0 [shape = 'u32[]', space=smem, size = 0x4, offset = 0x4, fixed_abs, tag = 'smem constant byte address 0x4 - core index']
  #allocation1 [shape = 'u32[144,128]{1,0:T(1,128)}', space=vmem, size = 0x12000, scoped, tag = 'internal scratch']
  %s0 = inlined_call_operand.vmem [shape: f32[64,2], index: 0, kind: input, shape index: {}]
  %s1 = inlined_call_operand.vmem [shape: f32[3,64,64], index: 1, kind: input, shape index: {}]
  %s2 = inlined_call_operand.vmem [shape: f32[3,32,64], index: 2, kind: input, shape index: {}]
  %s3 = inlined_call_operand.vmem [shape: f32[3,16,32], index: 3, kind: input, shape index: {}]
  %s4 = inlined_call_operand.hbm [shape: f32[3,8,16], index: 4, kind: input, shape index: {}]
  %s5 = inlined_call_operand.hbm [shape: f32[2,2,8], index: 5, kind: input, shape index: {}]
  %s6 = inlined_call_operand.hbm [shape: f32[6,8], index: 6, kind: input, shape index: {}]
  %s7 = inlined_call_operand.vmem [shape: f32[24,16], index: 7, kind: input, shape index: {}]
  %s8 = inlined_call_operand.vmem [shape: f32[48,16], index: 8, kind: input, shape index: {}]
  %s9 = inlined_call_operand.vmem [shape: f32[48,32], index: 9, kind: input, shape index: {}]
  %s10 = inlined_call_operand.vmem [shape: f32[64,32], index: 10, kind: input, shape index: {}]
  %s11 = inlined_call_operand.hbm [shape: f32[2,32], index: 11, kind: output, shape index: {}]
  %s12 = sld [smem:[#allocation0]]
  $region66: #{encoder_forward.1} parent=0
    _
  %s14 = ssub.s32 1, %s12
  %s15 = scalar_select 0, %s14, %s12
  $region1: #{encoder_forward.1} parent=0
    #allocation2 [shape = 'u8[12288]{0}', space=vmem, size = 0x3000, scoped, tag = 'input window, operand 4, single buffered']
    #allocation3 [shape = 's32[1]{0}', space=sflag, size = 0x4, scoped, tag = 'scoped memory for encoder_forward.1']
    #allocation4 [shape = 's32[1]{0}', space=sflag, size = 0x4, scoped, tag = 'scoped memory for encoder_forward.1']
    #allocation5 [shape = 'u8[2048]{0}', space=vmem, size = 0x800, scoped, tag = 'input window, operand 5, single buffered']
    #allocation6 [shape = 's32[1]{0}', space=sflag, size = 0x4, scoped, tag = 'scoped memory for encoder_forward.1']
    #allocation7 [shape = 'u8[4096]{0}', space=vmem, size = 0x1000, scoped, tag = 'input window, operand 6, single buffered']
    #allocation8 [shape = 'u8[1024]{0}', space=vmem, size = 0x400, scoped, tag = 'output window, operand 0, single buffered']
    %16 = vsyncpa [#allocation3], 0
    %17 = vsyncpa [#allocation6], 0
    %18 = vsyncpa [#allocation4], 0
    // Predicated region
    $region2: #{encoder_forward.1} parent=1 // pred_check
      _
    $region3: #{encoder_forward.1} parent=1 // pred_check_branch
      %20 = sbr.rel (0) target = $region5
    $region4: #{encoder_forward.1} parent=1 // pred_region
      _
    $region5: #{encoder_forward.1} parent=1 // pred_fallthru
      _
    // Predicated region
    $region6: #{encoder_forward.1} parent=1 // pred_check
      _
    $region7: #{encoder_forward.1} parent=1 // pred_check_branch
      %22 = sbr.rel (0) target = $region9
    $region8: #{encoder_forward.1} parent=1 // pred_region
      _
    $region9: #{encoder_forward.1} parent=1 // pred_fallthru
      _
    // Predicated region
    $region10: #{encoder_forward.1} parent=1 // pred_check
      _
    $region11: #{encoder_forward.1} parent=1 // pred_check_branch
      %24 = sbr.rel (0) target = $region13
    $region12: #{encoder_forward.1} parent=1 // pred_region
      _
    $region13: #{encoder_forward.1} parent=1 // pred_fallthru
      _
    // Predicated region
    $region14: #{encoder_forward.1} parent=1 // pred_check
      _
    $region15: #{encoder_forward.1} parent=1 // pred_check_branch
      %26 = sbr.rel (0) target = $region17
    $region16: #{encoder_forward.1} parent=1 // pred_region
      _
    $region17: #{encoder_forward.1} parent=1 // pred_fallthru
      _
    // Predicated region
    $region18: #{encoder_forward.1} parent=1 // pred_check
      _
    $region19: #{encoder_forward.1} parent=1 // pred_check_branch
      %28 = sbr.rel (0) target = $region21
    $region20: #{encoder_forward.1} parent=1 // pred_region
      %s30 = ssub.s32 384, 384
      %31 = vsyncadd [#allocation3], %s30
      %s32 = sshll.u32 [#allocation2], 4
      %s33 = int_to_ptr.vmem [resolvable:$true] %s32
      %38 = dma.hbm_to_vmem [thread:$0]  %s4, 384, %s33, [#allocation3], 128, 128, 8
    $region21: #{encoder_forward.1} parent=1 // pred_fallthru
      _
    // Predicated region
    $region22: #{encoder_forward.1} parent=1 // pred_check
      _
    $region23: #{encoder_forward.1} parent=1 // pred_check_branch
      %40 = sbr.rel (0) target = $region25
    $region24: #{encoder_forward.1} parent=1 // pred_region
      %s42 = ssub.s32 64, 64
      %43 = vsyncadd [#allocation6], %s42
      %s44 = sshll.u32 [#allocation5], 4
      %s45 = int_to_ptr.vmem [resolvable:$true] %s44
      %50 = dma.hbm_to_vmem [thread:$0]  %s5, 64, %s45, [#allocation6], 32, 32, 2
    $region25: #{encoder_forward.1} parent=1 // pred_fallthru
      _
    // Predicated region
    $region26: #{encoder_forward.1} parent=1 // pred_check
      _
    $region27: #{encoder_forward.1} parent=1 // pred_check_branch
      %52 = sbr.rel (0) target = $region29
    $region28: #{encoder_forward.1} parent=1 // pred_region
      %s54 = ssub.s32 128, 128
      %55 = vsyncadd [#allocation6], %s54
      %s57 = sshll.u32 [#allocation7], 4
      %s58 = int_to_ptr.vmem [resolvable:$true] %s57
      %60 = dma.hbm_to_vmem [thread:$0]  %s6, 128, %s58, [#allocation6]
    $region29: #{encoder_forward.1} parent=1 // pred_fallthru
      _
    // Predicated region
    $region30: #{encoder_forward.1} parent=1 // pred_check
      _
    $region31: #{encoder_forward.1} parent=1 // pred_check_branch
      %62 = sbr.rel (0) target = $region33
    $region32: #{encoder_forward.1} parent=1 // pred_region
      _
    $region33: #{encoder_forward.1} parent=1 // pred_fallthru
      _
    // Predicated region
    $region34: #{encoder_forward.1} parent=1 // pred_check
      _
    $region35: #{encoder_forward.1} parent=1 // pred_check_branch
      %64 = sbr.rel (0) target = $region37
    $region36: #{encoder_forward.1} parent=1 // pred_region
      _
    $region37: #{encoder_forward.1} parent=1 // pred_fallthru
      _
    // Predicated region
    $region38: #{encoder_forward.1} parent=1 // pred_check
      _
    $region39: #{encoder_forward.1} parent=1 // pred_check_branch
      %66 = sbr.rel (0) target = $region41
    $region40: #{encoder_forward.1} parent=1 // pred_region
      _
    $region41: #{encoder_forward.1} parent=1 // pred_fallthru
      _
    // Predicated region
    $region42: #{encoder_forward.1} parent=1 // pred_check
      _
    $region43: #{encoder_forward.1} parent=1 // pred_check_branch
      %68 = sbr.rel (0) target = $region45
    $region44: #{encoder_forward.1} parent=1 // pred_region
      _
    $region45: #{encoder_forward.1} parent=1 // pred_fallthru
      _
    // Predicated region
    $region46: #{encoder_forward.1} parent=1 // pred_check
      _
    $region47: #{encoder_forward.1} parent=1 // pred_check_branch
      %70 = sbr.rel (0) target = $region49
    $region48: #{encoder_forward.1} parent=1 // pred_region
      %71 = dma.done [#allocation3], 384
    $region49: #{encoder_forward.1} parent=1 // pred_fallthru
      _
    // Predicated region
    $region50: #{encoder_forward.1} parent=1 // pred_check
      _
    $region51: #{encoder_forward.1} parent=1 // pred_check_branch
      %73 = sbr.rel (0) target = $region53
    $region52: #{encoder_forward.1} parent=1 // pred_region
      %74 = dma.done [#allocation6], 64
    $region53: #{encoder_forward.1} parent=1 // pred_fallthru
      _
    // Predicated region
    $region54: #{encoder_forward.1} parent=1 // pred_check
      _
    $region55: #{encoder_forward.1} parent=1 // pred_check_branch
      %76 = sbr.rel (0) target = $region57
    $region56: #{encoder_forward.1} parent=1 // pred_region
      %77 = dma.done [#allocation6], 128
    $region57: #{encoder_forward.1} parent=1 // pred_fallthru
      _
    %v78 = vld [vmem:[%s0] sm:$0xff]
    %v79 = vld [vmem:[%s0 + $0x8] sm:$0xff]
    %v80 = vld [vmem:[%s0 + $0x10] sm:$0xff]
    %v81 = vld [vmem:[%s0 + $0x18] sm:$0xff]
    %v82 = vld [vmem:[%s0 + $0x20] sm:$0xff]
    %v83 = vld [vmem:[%s0 + $0x28] sm:$0xff]
    %v84 = vld [vmem:[%s0 + $0x30] sm:$0xff]
    %v85 = vld [vmem:[%s0 + $0x38] sm:$0xff]
    %v86 = vld [vmem:[%s1] sm:$0xff]
    %v87 = vld [vmem:[%s1 + $0x8] sm:$0xff]
    %v88 = vld [vmem:[%s1 + $0x10] sm:$0xff]
    %v89 = vld [vmem:[%s1 + $0x18] sm:$0xff]
    %v90 = vld [vmem:[%s1 + $0x20] sm:$0xff]
    %v91 = vld [vmem:[%s1 + $0x28] sm:$0xff]
    %v92 = vld [vmem:[%s1 + $0x30] sm:$0xff]
    %v93 = vld [vmem:[%s1 + $0x38] sm:$0xff]
    %vm94 = vcmask 523264
    %v96 = vsel %vm94, %v86, 0
    %v99 = vsel %vm94, %v87, 0
    %v102 = vsel %vm94, %v88, 0
    %v105 = vsel %vm94, %v89, 0
    %v108 = vsel %vm94, %v90, 0
    %v111 = vsel %vm94, %v91, 0
    %v114 = vsel %vm94, %v92, 0
    %v117 = vsel %vm94, %v93, 0
    %119 = vmatprep.subr.mxu0 0.0
    %120 = vmatpush1.msra.mxu0 %v78
    %121 = vmatprep.subr.mxu0 0.0
    %122 = vmatpush1.msra.mxu0 %v79
    %123 = vmatprep.subr.mxu0 0.0
    %124 = vmatpush1.msra.mxu0 %v80
    %125 = vmatprep.subr.mxu0 0.0
    %126 = vmatpush1.msra.mxu0 %v81
    %127 = vmatprep.subr.mxu0 0.0
    %128 = vmatpush1.msra.mxu0 %v82
    %129 = vmatprep.subr.mxu0 0.0
    %130 = vmatpush1.msra.mxu0 %v83
    %131 = vmatprep.subr.mxu0 0.0
    %132 = vmatpush1.msra.mxu0 %v84
    %133 = vmatprep.subr.mxu0 0.0
    %134 = vmatpush1.msra.mxu0 %v85
    %135 = vmatprep.subr.mxu0 0.0
    %136 = vmatpush1.msra.mxu0 0.0
    %137 = vmatprep.subr.mxu0 0.0
    %138 = vmatpush1.msra.mxu0 0.0
    %139 = vmatprep.subr.mxu0 0.0
    %140 = vmatpush1.msra.mxu0 0.0
    %141 = vmatprep.subr.mxu0 0.0
    %142 = vmatpush1.msra.mxu0 0.0
    %143 = vmatprep.subr.mxu0 0.0
    %144 = vmatpush1.msra.mxu0 0.0
    %145 = vmatprep.subr.mxu0 0.0
    %146 = vmatpush1.msra.mxu0 0.0
    %147 = vmatprep.subr.mxu0 0.0
    %148 = vmatpush1.msra.mxu0 0.0
    %149 = vmatprep.subr.mxu0 0.0
    %150 = vmatpush1.msra.mxu0 0.0
    %151 = vmatprep.subr.mxu0 0.0
    %152 = vmatpush1.msra.mxu0 0.0
    %153 = vmatprep.subr.mxu0 0.0
    %154 = vmatpush1.msra.mxu0 0.0
    %155 = vmatprep.subr.mxu0 0.0
    %156 = vmatpush1.msra.mxu0 0.0
    %157 = vmatprep.subr.mxu0 0.0
    %158 = vmatpush1.msra.mxu0 0.0
    %159 = vmatprep.subr.mxu0 0.0
    %160 = vmatpush1.msra.mxu0 0.0
    %161 = vmatprep.subr.mxu0 0.0
    %162 = vmatpush1.msra.mxu0 0.0
    %163 = vmatprep.subr.mxu0 0.0
    %164 = vmatpush1.msra.mxu0 0.0
    %165 = vmatprep.subr.mxu0 0.0
    %166 = vmatpush1.msra.mxu0 0.0
    %167 = vmatprep.subr.mxu0 0.0
    %168 = vmatpush1.msra.mxu0 0.0
    %169 = vmatprep.subr.mxu0 0.0
    %170 = vmatpush1.msra.mxu0 0.0
    %171 = vmatprep.subr.mxu0 0.0
    %172 = vmatpush1.msra.mxu0 0.0
    %173 = vmatprep.subr.mxu0 0.0
    %174 = vmatpush1.msra.mxu0 0.0
    %175 = vmatprep.subr.mxu0 0.0
    %176 = vmatpush1.msra.mxu0 0.0
    %177 = vmatprep.subr.mxu0 0.0
    %178 = vmatpush1.msra.mxu0 0.0
    %179 = vmatprep.subr.mxu0 0.0
    %180 = vmatpush1.msra.mxu0 0.0
    %181 = vmatprep.subr.mxu0 0.0
    %182 = vmatpush1.msra.mxu0 0.0
    %183 = vmatprep.mubr.f32.mxu0 0.0
    %184 = vmatmul.mubr.f32.gmra.mrb[0].mxu0 %v96
    %v185 = vpop.f32.mrb[0].mxu0
    %v186 = vadd.f32 0.0, %v185
    %v187 = vpop.f32.mrb[0].mxu0
    %188 = vmatprep.mubr.f32.mxu0 0.0
    %189 = vmatmul.mubr.f32.gmra.mrb[0].mxu0 %v99
    %v190 = vpop.f32.mrb[0].mxu0
    %v191 = vadd.f32 0.0, %v190
    %v192 = vpop.f32.mrb[0].mxu0
    %193 = vmatprep.mubr.f32.mxu0 0.0
    %194 = vmatmul.mubr.f32.gmra.mrb[0].mxu0 %v102
    %v195 = vpop.f32.mrb[0].mxu0
    %v196 = vadd.f32 0.0, %v195
    %v197 = vpop.f32.mrb[0].mxu0
    %198 = vmatprep.mubr.f32.mxu0 0.0
    %199 = vmatmul.mubr.f32.gmra.mrb[0].mxu0 %v105
    %v200 = vpop.f32.mrb[0].mxu0
    %v201 = vadd.f32 0.0, %v200
    %v202 = vpop.f32.mrb[0].mxu0
    %203 = vmatprep.mubr.f32.mxu0 0.0
    %204 = vmatmul.mubr.f32.gmra.mrb[0].mxu0 %v108
    %v205 = vpop.f32.mrb[0].mxu0
    %v206 = vadd.f32 0.0, %v205
    %v207 = vpop.f32.mrb[0].mxu0
    %208 = vmatprep.mubr.f32.mxu0 0.0
    %209 = vmatmul.mubr.f32.gmra.mrb[0].mxu0 %v111
    %v210 = vpop.f32.mrb[0].mxu0
    %v211 = vadd.f32 0.0, %v210
    %v212 = vpop.f32.mrb[0].mxu0
    %213 = vmatprep.mubr.f32.mxu0 0.0
    %214 = vmatmul.mubr.f32.gmra.mrb[0].mxu0 %v114
    %v215 = vpop.f32.mrb[0].mxu0
    %v216 = vadd.f32 0.0, %v215
    %v217 = vpop.f32.mrb[0].mxu0
    %218 = vmatprep.mubr.f32.mxu0 0.0
    %219 = vmatmul.mubr.f32.gmra.mrb[0].mxu0 %v117
    %v220 = vpop.f32.mrb[0].mxu0
    %v221 = vadd.f32 0.0, %v220
    %v222 = vpop.f32.mrb[0].mxu0
    %223 = vdwg.mxu0
    %s224 = scalar_lea.vmem %s1, 64
    %v225 = vld [vmem:[%s224] sm:$0xff]
    %v226 = vld [vmem:[%s224 + $0x8] sm:$0xff]
    %v227 = vld [vmem:[%s224 + $0x10] sm:$0xff]
    %v228 = vld [vmem:[%s224 + $0x18] sm:$0xff]
    %v229 = vld [vmem:[%s224 + $0x20] sm:$0xff]
    %v230 = vld [vmem:[%s224 + $0x28] sm:$0xff]
    %v231 = vld [vmem:[%s224 + $0x30] sm:$0xff]
    %v232 = vld [vmem:[%s224 + $0x38] sm:$0xff]
    %v234 = vsel %vm94, %v225, 0
    %v237 = vsel %vm94, %v226, 0
    %v240 = vsel %vm94, %v227, 0
    %v243 = vsel %vm94, %v228, 0
    %v246 = vsel %vm94, %v229, 0
    %v249 = vsel %vm94, %v230, 0
    %v252 = vsel %vm94, %v231, 0
    %v255 = vsel %vm94, %v232, 0
    %257 = vmatprep.subr.mxu0 0.0
    %258 = vmatpush1.msra.mxu0 %v78
    %259 = vmatprep.subr.mxu0 0.0
    %260 = vmatpush1.msra.mxu0 %v79
    %261 = vmatprep.subr.mxu0 0.0
    %262 = vmatpush1.msra.mxu0 %v80
    %263 = vmatprep.subr.mxu0 0.0
    %264 = vmatpush1.msra.mxu0 %v81
    %265 = vmatprep.subr.mxu0 0.0
    %266 = vmatpush1.msra.mxu0 %v82
    %267 = vmatprep.subr.mxu0 0.0
    %268 = vmatpush1.msra.mxu0 %v83
    %269 = vmatprep.subr.mxu0 0.0
    %270 = vmatpush1.msra.mxu0 %v84
    %271 = vmatprep.subr.mxu0 0.0
    %272 = vmatpush1.msra.mxu0 %v85
    %273 = vmatprep.subr.mxu0 0.0
    %274 = vmatpush1.msra.mxu0 0.0
    %275 = vmatprep.subr.mxu0 0.0
    %276 = vmatpush1.msra.mxu0 0.0
    %277 = vmatprep.subr.mxu0 0.0
    %278 = vmatpush1.msra.mxu0 0.0
    %279 = vmatprep.subr.mxu0 0.0
    %280 = vmatpush1.msra.mxu0 0.0
    %281 = vmatprep.subr.mxu0 0.0
    %282 = vmatpush1.msra.mxu0 0.0
    %283 = vmatprep.subr.mxu0 0.0
    %284 = vmatpush1.msra.mxu0 0.0
    %285 = vmatprep.subr.mxu0 0.0
    %286 = vmatpush1.msra.mxu0 0.0
    %287 = vmatprep.subr.mxu0 0.0
    %288 = vmatpush1.msra.mxu0 0.0
    %289 = vmatprep.subr.mxu0 0.0
    %290 = vmatpush1.msra.mxu0 0.0
    %291 = vmatprep.subr.mxu0 0.0
    %292 = vmatpush1.msra.mxu0 0.0
    %293 = vmatprep.subr.mxu0 0.0
    %294 = vmatpush1.msra.mxu0 0.0
    %295 = vmatprep.subr.mxu0 0.0
    %296 = vmatpush1.msra.mxu0 0.0
    %297 = vmatprep.subr.mxu0 0.0
    %298 = vmatpush1.msra.mxu0 0.0
    %299 = vmatprep.subr.mxu0 0.0
    %300 = vmatpush1.msra.mxu0 0.0
    %301 = vmatprep.subr.mxu0 0.0
    %302 = vmatpush1.msra.mxu0 0.0
    %303 = vmatprep.subr.mxu0 0.0
    %304 = vmatpush1.msra.mxu0 0.0
    %305 = vmatprep.subr.mxu0 0.0
    %306 = vmatpush1.msra.mxu0 0.0
    %307 = vmatprep.subr.mxu0 0.0
    %308 = vmatpush1.msra.mxu0 0.0
    %309 = vmatprep.subr.mxu0 0.0
    %310 = vmatpush1.msra.mxu0 0.0
    %311 = vmatprep.subr.mxu0 0.0
    %312 = vmatpush1.msra.mxu0 0.0
    %313 = vmatprep.subr.mxu0 0.0
    %314 = vmatpush1.msra.mxu0 0.0
    %315 = vmatprep.subr.mxu0 0.0
    %316 = vmatpush1.msra.mxu0 0.0
    %317 = vmatprep.subr.mxu0 0.0
    %318 = vmatpush1.msra.mxu0 0.0
    %319 = vmatprep.subr.mxu0 0.0
    %320 = vmatpush1.msra.mxu0 0.0
    %321 = vmatprep.mubr.f32.mxu0 0.0
    %322 = vmatmul.mubr.f32.gmra.mrb[0].mxu0 %v234
    %v323 = vpop.f32.mrb[0].mxu0
    %v324 = vadd.f32 0.0, %v323
    %v325 = vpop.f32.mrb[0].mxu0
    %326 = vmatprep.mubr.f32.mxu0 0.0
    %327 = vmatmul.mubr.f32.gmra.mrb[0].mxu0 %v237
    %v328 = vpop.f32.mrb[0].mxu0
    %v329 = vadd.f32 0.0, %v328
    %v330 = vpop.f32.mrb[0].mxu0
    %331 = vmatprep.mubr.f32.mxu0 0.0
    %332 = vmatmul.mubr.f32.gmra.mrb[0].mxu0 %v240
    %v333 = vpop.f32.mrb[0].mxu0
    %v334 = vadd.f32 0.0, %v333
    %v335 = vpop.f32.mrb[0].mxu0
    %336 = vmatprep.mubr.f32.mxu0 0.0
    %337 = vmatmul.mubr.f32.gmra.mrb[0].mxu0 %v243
    %v338 = vpop.f32.mrb[0].mxu0
    %v339 = vadd.f32 0.0, %v338
    %v340 = vpop.f32.mrb[0].mxu0
    %341 = vmatprep.mubr.f32.mxu0 0.0
    %342 = vmatmul.mubr.f32.gmra.mrb[0].mxu0 %v246
    %v343 = vpop.f32.mrb[0].mxu0
    %v344 = vadd.f32 0.0, %v343
    %v345 = vpop.f32.mrb[0].mxu0
    %346 = vmatprep.mubr.f32.mxu0 0.0
    %347 = vmatmul.mubr.f32.gmra.mrb[0].mxu0 %v249
    %v348 = vpop.f32.mrb[0].mxu0
    %v349 = vadd.f32 0.0, %v348
    %v350 = vpop.f32.mrb[0].mxu0
    %351 = vmatprep.mubr.f32.mxu0 0.0
    %352 = vmatmul.mubr.f32.gmra.mrb[0].mxu0 %v252
    %v353 = vpop.f32.mrb[0].mxu0
    %v354 = vadd.f32 0.0, %v353
    %v355 = vpop.f32.mrb[0].mxu0
    %356 = vmatprep.mubr.f32.mxu0 0.0
    %357 = vmatmul.mubr.f32.gmra.mrb[0].mxu0 %v255
    %v358 = vpop.f32.mrb[0].mxu0
    %v359 = vadd.f32 0.0, %v358
    %v360 = vpop.f32.mrb[0].mxu0
    %361 = vdwg.mxu0
    %s362 = scalar_lea.vmem %s1, 128
    %v363 = vld [vmem:[%s362] sm:$0xff]
    %v364 = vld [vmem:[%s362 + $0x8] sm:$0xff]
    %v365 = vld [vmem:[%s362 + $0x10] sm:$0xff]
    %v366 = vld [vmem:[%s362 + $0x18] sm:$0xff]
    %v367 = vld [vmem:[%s362 + $0x20] sm:$0xff]
    %v368 = vld [vmem:[%s362 + $0x28] sm:$0xff]
    %v369 = vld [vmem:[%s362 + $0x30] sm:$0xff]
    %v370 = vld [vmem:[%s362 + $0x38] sm:$0xff]
    %v372 = vsel %vm94, %v363, 0
    %v375 = vsel %vm94, %v364, 0
    %v378 = vsel %vm94, %v365, 0
    %v381 = vsel %vm94, %v366, 0
    %v384 = vsel %vm94, %v367, 0
    %v387 = vsel %vm94, %v368, 0
    %v390 = vsel %vm94, %v369, 0
    %v393 = vsel %vm94, %v370, 0
    %395 = vmatprep.subr.mxu0 0.0
    %396 = vmatpush1.msra.mxu0 %v78
    %397 = vmatprep.subr.mxu0 0.0
    %398 = vmatpush1.msra.mxu0 %v79
    %399 = vmatprep.subr.mxu0 0.0
    %400 = vmatpush1.msra.mxu0 %v80
    %401 = vmatprep.subr.mxu0 0.0
    %402 = vmatpush1.msra.mxu0 %v81
    %403 = vmatprep.subr.mxu0 0.0
    %404 = vmatpush1.msra.mxu0 %v82
    %405 = vmatprep.subr.mxu0 0.0
    %406 = vmatpush1.msra.mxu0 %v83
    %407 = vmatprep.subr.mxu0 0.0
    %408 = vmatpush1.msra.mxu0 %v84
    %409 = vmatprep.subr.mxu0 0.0
    %410 = vmatpush1.msra.mxu0 %v85
    %411 = vmatprep.subr.mxu0 0.0
    %412 = vmatpush1.msra.mxu0 0.0
    %413 = vmatprep.subr.mxu0 0.0
    %414 = vmatpush1.msra.mxu0 0.0
    %415 = vmatprep.subr.mxu0 0.0
    %416 = vmatpush1.msra.mxu0 0.0
    %417 = vmatprep.subr.mxu0 0.0
    %418 = vmatpush1.msra.mxu0 0.0
    %419 = vmatprep.subr.mxu0 0.0
    %420 = vmatpush1.msra.mxu0 0.0
    %421 = vmatprep.subr.mxu0 0.0
    %422 = vmatpush1.msra.mxu0 0.0
    %423 = vmatprep.subr.mxu0 0.0
    %424 = vmatpush1.msra.mxu0 0.0
    %425 = vmatprep.subr.mxu0 0.0
    %426 = vmatpush1.msra.mxu0 0.0
    %427 = vmatprep.subr.mxu0 0.0
    %428 = vmatpush1.msra.mxu0 0.0
    %429 = vmatprep.subr.mxu0 0.0
    %430 = vmatpush1.msra.mxu0 0.0
    %431 = vmatprep.subr.mxu0 0.0
    %432 = vmatpush1.msra.mxu0 0.0
    %433 = vmatprep.subr.mxu0 0.0
    %434 = vmatpush1.msra.mxu0 0.0
    %435 = vmatprep.subr.mxu0 0.0
    %436 = vmatpush1.msra.mxu0 0.0
    %437 = vmatprep.subr.mxu0 0.0
    %438 = vmatpush1.msra.mxu0 0.0
    %439 = vmatprep.subr.mxu0 0.0
    %440 = vmatpush1.msra.mxu0 0.0
    %441 = vmatprep.subr.mxu0 0.0
    %442 = vmatpush1.msra.mxu0 0.0
    %443 = vmatprep.subr.mxu0 0.0
    %444 = vmatpush1.msra.mxu0 0.0
    %445 = vmatprep.subr.mxu0 0.0
    %446 = vmatpush1.msra.mxu0 0.0
    %447 = vmatprep.subr.mxu0 0.0
    %448 = vmatpush1.msra.mxu0 0.0
    %449 = vmatprep.subr.mxu0 0.0
    %450 = vmatpush1.msra.mxu0 0.0
    %451 = vmatprep.subr.mxu0 0.0
    %452 = vmatpush1.msra.mxu0 0.0
    %453 = vmatprep.subr.mxu0 0.0
    %454 = vmatpush1.msra.mxu0 0.0
    %455 = vmatprep.subr.mxu0 0.0
    %456 = vmatpush1.msra.mxu0 0.0
    %457 = vmatprep.subr.mxu0 0.0
    %458 = vmatpush1.msra.mxu0 0.0
    %459 = vmatprep.mubr.f32.mxu0 0.0
    %460 = vmatmul.mubr.f32.gmra.mrb[0].mxu0 %v372
    %v461 = vpop.f32.mrb[0].mxu0
    %v462 = vadd.f32 0.0, %v461
    %v463 = vpop.f32.mrb[0].mxu0
    %464 = vmatprep.mubr.f32.mxu0 0.0
    %465 = vmatmul.mubr.f32.gmra.mrb[0].mxu0 %v375
    %v466 = vpop.f32.mrb[0].mxu0
    %v467 = vadd.f32 0.0, %v466
    %v468 = vpop.f32.mrb[0].mxu0
    %469 = vmatprep.mubr.f32.mxu0 0.0
    %470 = vmatmul.mubr.f32.gmra.mrb[0].mxu0 %v378
    %v471 = vpop.f32.mrb[0].mxu0
    %v472 = vadd.f32 0.0, %v471
    %v473 = vpop.f32.mrb[0].mxu0
    %474 = vmatprep.mubr.f32.mxu0 0.0
    %475 = vmatmul.mubr.f32.gmra.mrb[0].mxu0 %v381
    %v476 = vpop.f32.mrb[0].mxu0
    %v477 = vadd.f32 0.0, %v476
    %v478 = vpop.f32.mrb[0].mxu0
    %479 = vmatprep.mubr.f32.mxu0 0.0
    %480 = vmatmul.mubr.f32.gmra.mrb[0].mxu0 %v384
    %v481 = vpop.f32.mrb[0].mxu0
    %v482 = vadd.f32 0.0, %v481
    %v483 = vpop.f32.mrb[0].mxu0
    %484 = vmatprep.mubr.f32.mxu0 0.0
    %485 = vmatmul.mubr.f32.gmra.mrb[0].mxu0 %v387
    %v486 = vpop.f32.mrb[0].mxu0
    %v487 = vadd.f32 0.0, %v486
    %v488 = vpop.f32.mrb[0].mxu0
    %489 = vmatprep.mubr.f32.mxu0 0.0
    %490 = vmatmul.mubr.f32.gmra.mrb[0].mxu0 %v390
    %v491 = vpop.f32.mrb[0].mxu0
    %v492 = vadd.f32 0.0, %v491
    %v493 = vpop.f32.mrb[0].mxu0
    %494 = vmatprep.mubr.f32.mxu0 0.0
    %495 = vmatmul.mubr.f32.gmra.mrb[0].mxu0 %v393
    %v496 = vpop.f32.mrb[0].mxu0
    %v497 = vadd.f32 0.0, %v496
    %v498 = vpop.f32.mrb[0].mxu0
    %499 = vdwg.mxu0
    %508 = vrot.lane.b32.xlu0 %v324, 2
    %v509 = vpop.permute.xlu0 %508
    %510 = vrot.lane.b32.xlu0 %v329, 2
    %v511 = vpop.permute.xlu0 %510
    %512 = vrot.lane.b32.xlu0 %v334, 2
    %v513 = vpop.permute.xlu0 %512
    %514 = vrot.lane.b32.xlu0 %v339, 2
    %v515 = vpop.permute.xlu0 %514
    %516 = vrot.lane.b32.xlu0 %v344, 2
    %v517 = vpop.permute.xlu0 %516
    %518 = vrot.lane.b32.xlu0 %v349, 2
    %v519 = vpop.permute.xlu0 %518
    %520 = vrot.lane.b32.xlu0 %v354, 2
    %v521 = vpop.permute.xlu0 %520
    %522 = vrot.lane.b32.xlu0 %v359, 2
    %v523 = vpop.permute.xlu0 %522
    %540 = vrot.lane.b32.xlu0 %v462, 4
    %v541 = vpop.permute.xlu0 %540
    %542 = vrot.lane.b32.xlu0 %v467, 4
    %v543 = vpop.permute.xlu0 %542
    %544 = vrot.lane.b32.xlu0 %v472, 4
    %v545 = vpop.permute.xlu0 %544
    %546 = vrot.lane.b32.xlu0 %v477, 4
    %v547 = vpop.permute.xlu0 %546
    %548 = vrot.lane.b32.xlu0 %v482, 4
    %v549 = vpop.permute.xlu0 %548
    %550 = vrot.lane.b32.xlu0 %v487, 4
    %v551 = vpop.permute.xlu0 %550
    %552 = vrot.lane.b32.xlu0 %v492, 4
    %v553 = vpop.permute.xlu0 %552
    %554 = vrot.lane.b32.xlu0 %v497, 4
    %v555 = vpop.permute.xlu0 %554
    %vm564 = vcmask 15360
    %v565 = vsel %vm564, %v186, %v509
    %v566 = vsel %vm564, %v191, %v511
    %v567 = vsel %vm564, %v196, %v513
    %v568 = vsel %vm564, %v201, %v515
    %v569 = vsel %vm564, %v206, %v517
    %v570 = vsel %vm564, %v211, %v519
    %v571 = vsel %vm564, %v216, %v521
    %v572 = vsel %vm564, %v221, %v523
    %vm573 = vcmask 31744
    %v574 = vsel %vm573, %v565, %v541
    %v575 = vsel %vm573, %v566, %v543
    %v576 = vsel %vm573, %v567, %v545
    %v577 = vsel %vm573, %v568, %v547
    %v578 = vsel %vm573, %v569, %v549
    %v579 = vsel %vm573, %v570, %v551
    %v580 = vsel %vm573, %v571, %v553
    %v581 = vsel %vm573, %v572, %v555
    %v582 = vld [vmem:[#allocation7] sm:$0x3f]
    %vm583 = vcmask 48128
    %v585 = vsel %vm583, %v574, 0
    %v588 = vsel %vm583, %v575, 0
    %v591 = vsel %vm583, %v576, 0
    %v594 = vsel %vm583, %v577, 0
    %v597 = vsel %vm583, %v578, 0
    %v600 = vsel %vm583, %v579, 0
    %v603 = vsel %vm583, %v580, 0
    %v606 = vsel %vm583, %v581, 0
    %vm608 = vcmask 1045504
    %v610 = vsel %vm608, %v582, 0
    %612 = vmatprep.subr.mxu0 0.0
    %613 = vmatpush1.msra.mxu0 %v610
    %614 = vmatprep.subr.mxu0 0.0
    %615 = vmatpush1.msra.mxu0 0.0
    %616 = vmatprep.subr.mxu0 0.0
    %617 = vmatpush1.msra.mxu0 0.0
    %618 = vmatprep.subr.mxu0 0.0
    %619 = vmatpush1.msra.mxu0 0.0
    %620 = vmatprep.subr.mxu0 0.0
    %621 = vmatpush1.msra.mxu0 0.0
    %622 = vmatprep.subr.mxu0 0.0
    %623 = vmatpush1.msra.mxu0 0.0
    %624 = vmatprep.subr.mxu0 0.0
    %625 = vmatpush1.msra.mxu0 0.0
    %626 = vmatprep.subr.mxu0 0.0
    %627 = vmatpush1.msra.mxu0 0.0
    %628 = vmatprep.subr.mxu0 0.0
    %629 = vmatpush1.msra.mxu0 0.0
    %630 = vmatprep.subr.mxu0 0.0
    %631 = vmatpush1.msra.mxu0 0.0
    %632 = vmatprep.subr.mxu0 0.0
    %633 = vmatpush1.msra.mxu0 0.0
    %634 = vmatprep.subr.mxu0 0.0
    %635 = vmatpush1.msra.mxu0 0.0
    %636 = vmatprep.subr.mxu0 0.0
    %637 = vmatpush1.msra.mxu0 0.0
    %638 = vmatprep.subr.mxu0 0.0
    %639 = vmatpush1.msra.mxu0 0.0
    %640 = vmatprep.subr.mxu0 0.0
    %641 = vmatpush1.msra.mxu0 0.0
    %642 = vmatprep.subr.mxu0 0.0
    %643 = vmatpush1.msra.mxu0 0.0
    %644 = vmatprep.subr.mxu0 0.0
    %645 = vmatpush1.msra.mxu0 0.0
    %646 = vmatprep.subr.mxu0 0.0
    %647 = vmatpush1.msra.mxu0 0.0
    %648 = vmatprep.subr.mxu0 0.0
    %649 = vmatpush1.msra.mxu0 0.0
    %650 = vmatprep.subr.mxu0 0.0
    %651 = vmatpush1.msra.mxu0 0.0
    %652 = vmatprep.subr.mxu0 0.0
    %653 = vmatpush1.msra.mxu0 0.0
    %654 = vmatprep.subr.mxu0 0.0
    %655 = vmatpush1.msra.mxu0 0.0
    %656 = vmatprep.subr.mxu0 0.0
    %657 = vmatpush1.msra.mxu0 0.0
    %658 = vmatprep.subr.mxu0 0.0
    %659 = vmatpush1.msra.mxu0 0.0
    %660 = vmatprep.subr.mxu0 0.0
    %661 = vmatpush1.msra.mxu0 0.0
    %662 = vmatprep.subr.mxu0 0.0
    %663 = vmatpush1.msra.mxu0 0.0
    %664 = vmatprep.subr.mxu0 0.0
    %665 = vmatpush1.msra.mxu0 0.0
    %666 = vmatprep.subr.mxu0 0.0
    %667 = vmatpush1.msra.mxu0 0.0
    %668 = vmatprep.subr.mxu0 0.0
    %669 = vmatpush1.msra.mxu0 0.0
    %670 = vmatprep.subr.mxu0 0.0
    %671 = vmatpush1.msra.mxu0 0.0
    %672 = vmatprep.subr.mxu0 0.0
    %673 = vmatpush1.msra.mxu0 0.0
    %674 = vmatprep.subr.mxu0 0.0
    %675 = vmatpush1.msra.mxu0 0.0
    %676 = vmatprep.mubr.f32.mxu0 0.0
    %677 = vmatmul.mubr.f32.gmra.mrb[0].mxu0 %v585
    %v678 = vpop.f32.mrb[0].mxu0
    %v679 = vadd.f32 0.0, %v678
    %v680 = vpop.f32.mrb[0].mxu0
    %681 = vmatprep.mubr.f32.mxu0 0.0
    %682 = vmatmul.mubr.f32.gmra.mrb[0].mxu0 %v588
    %v683 = vpop.f32.mrb[0].mxu0
    %v684 = vadd.f32 0.0, %v683
    %v685 = vpop.f32.mrb[0].mxu0
    %686 = vmatprep.mubr.f32.mxu0 0.0
    %687 = vmatmul.mubr.f32.gmra.mrb[0].mxu0 %v591
    %v688 = vpop.f32.mrb[0].mxu0
    %v689 = vadd.f32 0.0, %v688
    %v690 = vpop.f32.mrb[0].mxu0
    %691 = vmatprep.mubr.f32.mxu0 0.0
    %692 = vmatmul.mubr.f32.gmra.mrb[0].mxu0 %v594
    %v693 = vpop.f32.mrb[0].mxu0
    %v694 = vadd.f32 0.0, %v693
    %v695 = vpop.f32.mrb[0].mxu0
    %696 = vmatprep.mubr.f32.mxu0 0.0
    %697 = vmatmul.mubr.f32.gmra.mrb[0].mxu0 %v597
    %v698 = vpop.f32.mrb[0].mxu0
    %v699 = vadd.f32 0.0, %v698
    %v700 = vpop.f32.mrb[0].mxu0
    %701 = vmatprep.mubr.f32.mxu0 0.0
    %702 = vmatmul.mubr.f32.gmra.mrb[0].mxu0 %v600
    %v703 = vpop.f32.mrb[0].mxu0
    %v704 = vadd.f32 0.0, %v703
    %v705 = vpop.f32.mrb[0].mxu0
    %706 = vmatprep.mubr.f32.mxu0 0.0
    %707 = vmatmul.mubr.f32.gmra.mrb[0].mxu0 %v603
    %v708 = vpop.f32.mrb[0].mxu0
    %v709 = vadd.f32 0.0, %v708
    %v710 = vpop.f32.mrb[0].mxu0
    %711 = vmatprep.mubr.f32.mxu0 0.0
    %712 = vmatmul.mubr.f32.gmra.mrb[0].mxu0 %v606
    %v713 = vpop.f32.mrb[0].mxu0
    %v714 = vadd.f32 0.0, %v713
    %v715 = vpop.f32.mrb[0].mxu0
    %716 = vdwg.mxu0
    %vm717 = vcmp.gt.f32.partialorder %v679, 0.0
    %vm718 = vcmp.gt.f32.partialorder %v684, 0.0
    %vm719 = vcmp.gt.f32.partialorder %v689, 0.0
    %vm720 = vcmp.gt.f32.partialorder %v694, 0.0
    %vm721 = vcmp.gt.f32.partialorder %v699, 0.0
    %vm722 = vcmp.gt.f32.partialorder %v704, 0.0
    %vm723 = vcmp.gt.f32.partialorder %v709, 0.0
    %vm724 = vcmp.gt.f32.partialorder %v714, 0.0
    %v725 = vmul.f32 %v679, 0.2
    %v726 = vmul.f32 %v684, 0.2
    %v727 = vmul.f32 %v689, 0.2
    %v728 = vmul.f32 %v694, 0.2
    %v729 = vmul.f32 %v699, 0.2
    %v730 = vmul.f32 %v704, 0.2
    %v731 = vmul.f32 %v709, 0.2
    %v732 = vmul.f32 %v714, 0.2
    %v733 = vsel %vm717, %v679, %v725
    %v734 = vsel %vm718, %v684, %v726
    %v735 = vsel %vm719, %v689, %v727
    %v736 = vsel %vm720, %v694, %v728
    %v737 = vsel %vm721, %v699, %v729
    %v738 = vsel %vm722, %v704, %v730
    %v739 = vsel %vm723, %v709, %v731
    %v740 = vsel %vm724, %v714, %v732
    %v741 = vld [vmem:[%s2] sm:$0xff]
    %v742 = vld [vmem:[%s2 + $0x8] sm:$0xff]
    %v743 = vld [vmem:[%s2 + $0x10] sm:$0xff]
    %v744 = vld [vmem:[%s2 + $0x18] sm:$0xff]
    %v746 = vsel %vm94, %v741, 0
    %v749 = vsel %vm94, %v742, 0
    %v752 = vsel %vm94, %v743, 0
    %v755 = vsel %vm94, %v744, 0
    %757 = vmatprep.subr.mxu0 0.0
    %758 = vmatpush1.msra.mxu0 %v733
    %759 = vmatprep.subr.mxu0 0.0
    %760 = vmatpush1.msra.mxu0 %v734
    %761 = vmatprep.subr.mxu0 0.0
    %762 = vmatpush1.msra.mxu0 %v735
    %763 = vmatprep.subr.mxu0 0.0
    %764 = vmatpush1.msra.mxu0 %v736
    %765 = vmatprep.subr.mxu0 0.0
    %766 = vmatpush1.msra.mxu0 %v737
    %767 = vmatprep.subr.mxu0 0.0
    %768 = vmatpush1.msra.mxu0 %v738
    %769 = vmatprep.subr.mxu0 0.0
    %770 = vmatpush1.msra.mxu0 %v739
    %771 = vmatprep.subr.mxu0 0.0
    %772 = vmatpush1.msra.mxu0 %v740
    %773 = vmatprep.subr.mxu0 0.0
    %774 = vmatpush1.msra.mxu0 0.0
    %775 = vmatprep.subr.mxu0 0.0
    %776 = vmatpush1.msra.mxu0 0.0
    %777 = vmatprep.subr.mxu0 0.0
    %778 = vmatpush1.msra.mxu0 0.0
    %779 = vmatprep.subr.mxu0 0.0
    %780 = vmatpush1.msra.mxu0 0.0
    %781 = vmatprep.subr.mxu0 0.0
    %782 = vmatpush1.msra.mxu0 0.0
    %783 = vmatprep.subr.mxu0 0.0
    %784 = vmatpush1.msra.mxu0 0.0
    %785 = vmatprep.subr.mxu0 0.0
    %786 = vmatpush1.msra.mxu0 0.0
    %787 = vmatprep.subr.mxu0 0.0
    %788 = vmatpush1.msra.mxu0 0.0
    %789 = vmatprep.subr.mxu0 0.0
    %790 = vmatpush1.msra.mxu0 0.0
    %791 = vmatprep.subr.mxu0 0.0
    %792 = vmatpush1.msra.mxu0 0.0
    %793 = vmatprep.subr.mxu0 0.0
    %794 = vmatpush1.msra.mxu0 0.0
    %795 = vmatprep.subr.mxu0 0.0
    %796 = vmatpush1.msra.mxu0 0.0
    %797 = vmatprep.subr.mxu0 0.0
    %798 = vmatpush1.msra.mxu0 0.0
    %799 = vmatprep.subr.mxu0 0.0
    %800 = vmatpush1.msra.mxu0 0.0
    %801 = vmatprep.subr.mxu0 0.0
    %802 = vmatpush1.msra.mxu0 0.0
    %803 = vmatprep.subr.mxu0 0.0
    %804 = vmatpush1.msra.mxu0 0.0
    %805 = vmatprep.subr.mxu0 0.0
    %806 = vmatpush1.msra.mxu0 0.0
    %807 = vmatprep.subr.mxu0 0.0
    %808 = vmatpush1.msra.mxu0 0.0
    %809 = vmatprep.subr.mxu0 0.0
    %810 = vmatpush1.msra.mxu0 0.0
    %811 = vmatprep.subr.mxu0 0.0
    %812 = vmatpush1.msra.mxu0 0.0
    %813 = vmatprep.subr.mxu0 0.0
    %814 = vmatpush1.msra.mxu0 0.0
    %815 = vmatprep.subr.mxu0 0.0
    %816 = vmatpush1.msra.mxu0 0.0
    %817 = vmatprep.subr.mxu0 0.0
    %818 = vmatpush1.msra.mxu0 0.0
    %819 = vmatprep.subr.mxu0 0.0
    %820 = vmatpush1.msra.mxu0 0.0
    %821 = vmatprep.mubr.f32.mxu0 0.0
    %822 = vmatmul.mubr.f32.gmra.mrb[0].mxu0 %v746
    %v823 = vpop.f32.mrb[0].mxu0
    %v824 = vadd.f32 0.0, %v823
    %v825 = vpop.f32.mrb[0].mxu0
    %826 = vmatprep.mubr.f32.mxu0 0.0
    %827 = vmatmul.mubr.f32.gmra.mrb[0].mxu0 %v749
    %v828 = vpop.f32.mrb[0].mxu0
    %v829 = vadd.f32 0.0, %v828
    %v830 = vpop.f32.mrb[0].mxu0
    %831 = vmatprep.mubr.f32.mxu0 0.0
    %832 = vmatmul.mubr.f32.gmra.mrb[0].mxu0 %v752
    %v833 = vpop.f32.mrb[0].mxu0
    %v834 = vadd.f32 0.0, %v833
    %v835 = vpop.f32.mrb[0].mxu0
    %836 = vmatprep.mubr.f32.mxu0 0.0
    %837 = vmatmul.mubr.f32.gmra.mrb[0].mxu0 %v755
    %v838 = vpop.f32.mrb[0].mxu0
    %v839 = vadd.f32 0.0, %v838
    %v840 = vpop.f32.mrb[0].mxu0
    %841 = vdwg.mxu0
    %s842 = scalar_lea.vmem %s2, 32
    %v843 = vld [vmem:[%s842] sm:$0xff]
    %v844 = vld [vmem:[%s842 + $0x8] sm:$0xff]
    %v845 = vld [vmem:[%s842 + $0x10] sm:$0xff]
    %v846 = vld [vmem:[%s842 + $0x18] sm:$0xff]
    %v848 = vsel %vm94, %v843, 0
    %v851 = vsel %vm94, %v844, 0
    %v854 = vsel %vm94, %v845, 0
    %v857 = vsel %vm94, %v846, 0
    %859 = vmatprep.subr.mxu0 0.0
    %860 = vmatpush1.msra.mxu0 %v733
    %861 = vmatprep.subr.mxu0 0.0
    %862 = vmatpush1.msra.mxu0 %v734
    %863 = vmatprep.subr.mxu0 0.0
    %864 = vmatpush1.msra.mxu0 %v735
    %865 = vmatprep.subr.mxu0 0.0
    %866 = vmatpush1.msra.mxu0 %v736
    %867 = vmatprep.subr.mxu0 0.0
    %868 = vmatpush1.msra.mxu0 %v737
    %869 = vmatprep.subr.mxu0 0.0
    %870 = vmatpush1.msra.mxu0 %v738
    %871 = vmatprep.subr.mxu0 0.0
    %872 = vmatpush1.msra.mxu0 %v739
    %873 = vmatprep.subr.mxu0 0.0
    %874 = vmatpush1.msra.mxu0 %v740
    %875 = vmatprep.subr.mxu0 0.0
    %876 = vmatpush1.msra.mxu0 0.0
    %877 = vmatprep.subr.mxu0 0.0
    %878 = vmatpush1.msra.mxu0 0.0
    %879 = vmatprep.subr.mxu0 0.0
    %880 = vmatpush1.msra.mxu0 0.0
    %881 = vmatprep.subr.mxu0 0.0
    %882 = vmatpush1.msra.mxu0 0.0
    %883 = vmatprep.subr.mxu0 0.0
    %884 = vmatpush1.msra.mxu0 0.0
    %885 = vmatprep.subr.mxu0 0.0
    %886 = vmatpush1.msra.mxu0 0.0
    %887 = vmatprep.subr.mxu0 0.0
    %888 = vmatpush1.msra.mxu0 0.0
    %889 = vmatprep.subr.mxu0 0.0
    %890 = vmatpush1.msra.mxu0 0.0
    %891 = vmatprep.subr.mxu0 0.0
    %892 = vmatpush1.msra.mxu0 0.0
    %893 = vmatprep.subr.mxu0 0.0
    %894 = vmatpush1.msra.mxu0 0.0
    %895 = vmatprep.subr.mxu0 0.0
    %896 = vmatpush1.msra.mxu0 0.0
    %897 = vmatprep.subr.mxu0 0.0
    %898 = vmatpush1.msra.mxu0 0.0
    %899 = vmatprep.subr.mxu0 0.0
    %900 = vmatpush1.msra.mxu0 0.0
    %901 = vmatprep.subr.mxu0 0.0
    %902 = vmatpush1.msra.mxu0 0.0
    %903 = vmatprep.subr.mxu0 0.0
    %904 = vmatpush1.msra.mxu0 0.0
    %905 = vmatprep.subr.mxu0 0.0
    %906 = vmatpush1.msra.mxu0 0.0
    %907 = vmatprep.subr.mxu0 0.0
    %908 = vmatpush1.msra.mxu0 0.0
    %909 = vmatprep.subr.mxu0 0.0
    %910 = vmatpush1.msra.mxu0 0.0
    %911 = vmatprep.subr.mxu0 0.0
    %912 = vmatpush1.msra.mxu0 0.0
    %913 = vmatprep.subr.mxu0 0.0
    %914 = vmatpush1.msra.mxu0 0.0
    %915 = vmatprep.subr.mxu0 0.0
    %916 = vmatpush1.msra.mxu0 0.0
    %917 = vmatprep.subr.mxu0 0.0
    %918 = vmatpush1.msra.mxu0 0.0
    %919 = vmatprep.subr.mxu0 0.0
    %920 = vmatpush1.msra.mxu0 0.0
    %921 = vmatprep.subr.mxu0 0.0
    %922 = vmatpush1.msra.mxu0 0.0
    %923 = vmatprep.mubr.f32.mxu0 0.0
    %924 = vmatmul.mubr.f32.gmra.mrb[0].mxu0 %v848
    %v925 = vpop.f32.mrb[0].mxu0
    %v926 = vadd.f32 0.0, %v925
    %v927 = vpop.f32.mrb[0].mxu0
    %928 = vmatprep.mubr.f32.mxu0 0.0
    %929 = vmatmul.mubr.f32.gmra.mrb[0].mxu0 %v851
    %v930 = vpop.f32.mrb[0].mxu0
    %v931 = vadd.f32 0.0, %v930
    %v932 = vpop.f32.mrb[0].mxu0
    %933 = vmatprep.mubr.f32.mxu0 0.0
    %934 = vmatmul.mubr.f32.gmra.mrb[0].mxu0 %v854
    %v935 = vpop.f32.mrb[0].mxu0
    %v936 = vadd.f32 0.0, %v935
    %v937 = vpop.f32.mrb[0].mxu0
    %938 = vmatprep.mubr.f32.mxu0 0.0
    %939 = vmatmul.mubr.f32.gmra.mrb[0].mxu0 %v857
    %v940 = vpop.f32.mrb[0].mxu0
    %v941 = vadd.f32 0.0, %v940
    %v942 = vpop.f32.mrb[0].mxu0
    %943 = vdwg.mxu0
    %s944 = scalar_lea.vmem %s2, 64
    %v945 = vld [vmem:[%s944] sm:$0xff]
    %v946 = vld [vmem:[%s944 + $0x8] sm:$0xff]
    %v947 = vld [vmem:[%s944 + $0x10] sm:$0xff]
    %v948 = vld [vmem:[%s944 + $0x18] sm:$0xff]
    %v950 = vsel %vm94, %v945, 0
    %v953 = vsel %vm94, %v946, 0
    %v956 = vsel %vm94, %v947, 0
    %v959 = vsel %vm94, %v948, 0
    %961 = vmatprep.subr.mxu0 0.0
    %962 = vmatpush1.msra.mxu0 %v733
    %963 = vmatprep.subr.mxu0 0.0
    %964 = vmatpush1.msra.mxu0 %v734
    %965 = vmatprep.subr.mxu0 0.0
    %966 = vmatpush1.msra.mxu0 %v735
    %967 = vmatprep.subr.mxu0 0.0
    %968 = vmatpush1.msra.mxu0 %v736
    %969 = vmatprep.subr.mxu0 0.0
    %970 = vmatpush1.msra.mxu0 %v737
    %971 = vmatprep.subr.mxu0 0.0
    %972 = vmatpush1.msra.mxu0 %v738
    %973 = vmatprep.subr.mxu0 0.0
    %974 = vmatpush1.msra.mxu0 %v739
    %975 = vmatprep.subr.mxu0 0.0
    %976 = vmatpush1.msra.mxu0 %v740
    %977 = vmatprep.subr.mxu0 0.0
    %978 = vmatpush1.msra.mxu0 0.0
    %979 = vmatprep.subr.mxu0 0.0
    %980 = vmatpush1.msra.mxu0 0.0
    %981 = vmatprep.subr.mxu0 0.0
    %982 = vmatpush1.msra.mxu0 0.0
    %983 = vmatprep.subr.mxu0 0.0
    %984 = vmatpush1.msra.mxu0 0.0
    %985 = vmatprep.subr.mxu0 0.0
    %986 = vmatpush1.msra.mxu0 0.0
    %987 = vmatprep.subr.mxu0 0.0
    %988 = vmatpush1.msra.mxu0 0.0
    %989 = vmatprep.subr.mxu0 0.0
    %990 = vmatpush1.msra.mxu0 0.0
    %991 = vmatprep.subr.mxu0 0.0
    %992 = vmatpush1.msra.mxu0 0.0
    %993 = vmatprep.subr.mxu0 0.0
    %994 = vmatpush1.msra.mxu0 0.0
    %995 = vmatprep.subr.mxu0 0.0
    %996 = vmatpush1.msra.mxu0 0.0
    %997 = vmatprep.subr.mxu0 0.0
    %998 = vmatpush1.msra.mxu0 0.0
    %999 = vmatprep.subr.mxu0 0.0
    %1000 = vmatpush1.msra.mxu0 0.0
    %1001 = vmatprep.subr.mxu0 0.0
    %1002 = vmatpush1.msra.mxu0 0.0
    %1003 = vmatprep.subr.mxu0 0.0
    %1004 = vmatpush1.msra.mxu0 0.0
    %1005 = vmatprep.subr.mxu0 0.0
    %1006 = vmatpush1.msra.mxu0 0.0
    %1007 = vmatprep.subr.mxu0 0.0
    %1008 = vmatpush1.msra.mxu0 0.0
    %1009 = vmatprep.subr.mxu0 0.0
    %1010 = vmatpush1.msra.mxu0 0.0
    %1011 = vmatprep.subr.mxu0 0.0
    %1012 = vmatpush1.msra.mxu0 0.0
    %1013 = vmatprep.subr.mxu0 0.0
    %1014 = vmatpush1.msra.mxu0 0.0
    %1015 = vmatprep.subr.mxu0 0.0
    %1016 = vmatpush1.msra.mxu0 0.0
    %1017 = vmatprep.subr.mxu0 0.0
    %1018 = vmatpush1.msra.mxu0 0.0
    %1019 = vmatprep.subr.mxu0 0.0
    %1020 = vmatpush1.msra.mxu0 0.0
    %1021 = vmatprep.subr.mxu0 0.0
    %1022 = vmatpush1.msra.mxu0 0.0
    %1023 = vmatprep.subr.mxu0 0.0
    %1024 = vmatpush1.msra.mxu0 0.0
    %1025 = vmatprep.mubr.f32.mxu0 0.0
    %1026 = vmatmul.mubr.f32.gmra.mrb[0].mxu0 %v950
    %v1027 = vpop.f32.mrb[0].mxu0
    %v1028 = vadd.f32 0.0, %v1027
    %v1029 = vpop.f32.mrb[0].mxu0
    %1030 = vmatprep.mubr.f32.mxu0 0.0
    %1031 = vmatmul.mubr.f32.gmra.mrb[0].mxu0 %v953
    %v1032 = vpop.f32.mrb[0].mxu0
    %v1033 = vadd.f32 0.0, %v1032
    %v1034 = vpop.f32.mrb[0].mxu0
    %1035 = vmatprep.mubr.f32.mxu0 0.0
    %1036 = vmatmul.mubr.f32.gmra.mrb[0].mxu0 %v956
    %v1037 = vpop.f32.mrb[0].mxu0
    %v1038 = vadd.f32 0.0, %v1037
    %v1039 = vpop.f32.mrb[0].mxu0
    %1040 = vmatprep.mubr.f32.mxu0 0.0
    %1041 = vmatmul.mubr.f32.gmra.mrb[0].mxu0 %v959
    %v1042 = vpop.f32.mrb[0].mxu0
    %v1043 = vadd.f32 0.0, %v1042
    %v1044 = vpop.f32.mrb[0].mxu0
    %1045 = vdwg.mxu0
    %1050 = vrot.lane.b32.xlu0 %v926, 8
    %v1051 = vpop.permute.xlu0 %1050
    %1052 = vrot.lane.b32.xlu0 %v931, 8
    %v1053 = vpop.permute.xlu0 %1052
    %1054 = vrot.lane.b32.xlu0 %v936, 8
    %v1055 = vpop.permute.xlu0 %1054
    %1056 = vrot.lane.b32.xlu0 %v941, 8
    %v1057 = vpop.permute.xlu0 %1056
    %1066 = vrot.lane.b32.xlu0 %v1028, 16
    %v1067 = vpop.permute.xlu0 %1066
    %1068 = vrot.lane.b32.xlu0 %v1033, 16
    %v1069 = vpop.permute.xlu0 %1068
    %1070 = vrot.lane.b32.xlu0 %v1038, 16
    %v1071 = vpop.permute.xlu0 %1070
    %1072 = vrot.lane.b32.xlu0 %v1043, 16
    %v1073 = vpop.permute.xlu0 %1072
    %vm1078 = vcmask 64512
    %v1079 = vsel %vm1078, %v824, %v1051
    %v1080 = vsel %vm1078, %v829, %v1053
    %v1081 = vsel %vm1078, %v834, %v1055
    %v1082 = vsel %vm1078, %v839, %v1057
    %vm1083 = vcmask 130048
    %v1084 = vsel %vm1083, %v1079, %v1067
    %v1085 = vsel %vm1083, %v1080, %v1069
    %v1086 = vsel %vm1083, %v1081, %v1071
    %v1087 = vsel %vm1083, %v1082, %v1073
    %v1088 = vld [vmem:[%s7] sm:$0xff]
    %v1089 = vld [vmem:[%s7 + $0x8] sm:$0xff]
    %v1090 = vld [vmem:[%s7 + $0x10] sm:$0xff]
    %vm1091 = vcmask 195584
    %v1093 = vsel %vm1091, %v1084, 0
    %v1096 = vsel %vm1091, %v1085, 0
    %v1099 = vsel %vm1091, %v1086, 0
    %v1102 = vsel %vm1091, %v1087, 0
    %1104 = vmatprep.subr.mxu0 0.0
    %1105 = vmatpush1.msra.mxu0 %v1088
    %1106 = vmatprep.subr.mxu0 0.0
    %1107 = vmatpush1.msra.mxu0 %v1089
    %1108 = vmatprep.subr.mxu0 0.0
    %1109 = vmatpush1.msra.mxu0 %v1090
    %1110 = vmatprep.subr.mxu0 0.0
    %1111 = vmatpush1.msra.mxu0 0.0
    %1112 = vmatprep.subr.mxu0 0.0
    %1113 = vmatpush1.msra.mxu0 0.0
    %1114 = vmatprep.subr.mxu0 0.0
    %1115 = vmatpush1.msra.mxu0 0.0
    %1116 = vmatprep.subr.mxu0 0.0
    %1117 = vmatpush1.msra.mxu0 0.0
    %1118 = vmatprep.subr.mxu0 0.0
    %1119 = vmatpush1.msra.mxu0 0.0
    %1120 = vmatprep.subr.mxu0 0.0
    %1121 = vmatpush1.msra.mxu0 0.0
    %1122 = vmatprep.subr.mxu0 0.0
    %1123 = vmatpush1.msra.mxu0 0.0
    %1124 = vmatprep.subr.mxu0 0.0
    %1125 = vmatpush1.msra.mxu0 0.0
    %1126 = vmatprep.subr.mxu0 0.0
    %1127 = vmatpush1.msra.mxu0 0.0
    %1128 = vmatprep.subr.mxu0 0.0
    %1129 = vmatpush1.msra.mxu0 0.0
    %1130 = vmatprep.subr.mxu0 0.0
    %1131 = vmatpush1.msra.mxu0 0.0
    %1132 = vmatprep.subr.mxu0 0.0
    %1133 = vmatpush1.msra.mxu0 0.0
    %1134 = vmatprep.subr.mxu0 0.0
    %1135 = vmatpush1.msra.mxu0 0.0
    %1136 = vmatprep.subr.mxu0 0.0
    %1137 = vmatpush1.msra.mxu0 0.0
    %1138 = vmatprep.subr.mxu0 0.0
    %1139 = vmatpush1.msra.mxu0 0.0
    %1140 = vmatprep.subr.mxu0 0.0
    %1141 = vmatpush1.msra.mxu0 0.0
    %1142 = vmatprep.subr.mxu0 0.0
    %1143 = vmatpush1.msra.mxu0 0.0
    %1144 = vmatprep.subr.mxu0 0.0
    %1145 = vmatpush1.msra.mxu0 0.0
    %1146 = vmatprep.subr.mxu0 0.0
    %1147 = vmatpush1.msra.mxu0 0.0
    %1148 = vmatprep.subr.mxu0 0.0
    %1149 = vmatpush1.msra.mxu0 0.0
    %1150 = vmatprep.subr.mxu0 0.0
    %1151 = vmatpush1.msra.mxu0 0.0
    %1152 = vmatprep.subr.mxu0 0.0
    %1153 = vmatpush1.msra.mxu0 0.0
    %1154 = vmatprep.subr.mxu0 0.0
    %1155 = vmatpush1.msra.mxu0 0.0
    %1156 = vmatprep.subr.mxu0 0.0
    %1157 = vmatpush1.msra.mxu0 0.0
    %1158 = vmatprep.subr.mxu0 0.0
    %1159 = vmatpush1.msra.mxu0 0.0
    %1160 = vmatprep.subr.mxu0 0.0
    %1161 = vmatpush1.msra.mxu0 0.0
    %1162 = vmatprep.subr.mxu0 0.0
    %1163 = vmatpush1.msra.mxu0 0.0
    %1164 = vmatprep.subr.mxu0 0.0
    %1165 = vmatpush1.msra.mxu0 0.0
    %1166 = vmatprep.subr.mxu0 0.0
    %1167 = vmatpush1.msra.mxu0 0.0
    %1168 = vmatprep.mubr.f32.mxu0 0.0
    %1169 = vmatmul.mubr.f32.gmra.mrb[0].mxu0 %v1093
    %v1170 = vpop.f32.mrb[0].mxu0
    %v1171 = vadd.f32 0.0, %v1170
    %v1172 = vpop.f32.mrb[0].mxu0
    %1173 = vmatprep.mubr.f32.mxu0 0.0
    %1174 = vmatmul.mubr.f32.gmra.mrb[0].mxu0 %v1096
    %v1175 = vpop.f32.mrb[0].mxu0
    %v1176 = vadd.f32 0.0, %v1175
    %v1177 = vpop.f32.mrb[0].mxu0
    %1178 = vmatprep.mubr.f32.mxu0 0.0
    %1179 = vmatmul.mubr.f32.gmra.mrb[0].mxu0 %v1099
    %v1180 = vpop.f32.mrb[0].mxu0
    %v1181 = vadd.f32 0.0, %v1180
    %v1182 = vpop.f32.mrb[0].mxu0
    %1183 = vmatprep.mubr.f32.mxu0 0.0
    %1184 = vmatmul.mubr.f32.gmra.mrb[0].mxu0 %v1102
    %v1185 = vpop.f32.mrb[0].mxu0
    %v1186 = vadd.f32 0.0, %v1185
    %v1187 = vpop.f32.mrb[0].mxu0
    %1188 = vdwg.mxu0
    %vm1189 = vcmp.gt.f32.partialorder %v1171, 0.0
    %vm1190 = vcmp.gt.f32.partialorder %v1176, 0.0
    %vm1191 = vcmp.gt.f32.partialorder %v1181, 0.0
    %vm1192 = vcmp.gt.f32.partialorder %v1186, 0.0
    %v1193 = vmul.f32 %v1171, 0.2
    %v1194 = vmul.f32 %v1176, 0.2
    %v1195 = vmul.f32 %v1181, 0.2
    %v1196 = vmul.f32 %v1186, 0.2
    %v1197 = vsel %vm1189, %v1171, %v1193
    %v1198 = vsel %vm1190, %v1176, %v1194
    %v1199 = vsel %vm1191, %v1181, %v1195
    %v1200 = vsel %vm1192, %v1186, %v1196
    %v1201 = vld [vmem:[%s3] sm:$0xff]
    %v1202 = vld [vmem:[%s3 + $0x8] sm:$0xff]
    %vm1203 = vcmask 261120
    %v1205 = vsel %vm1203, %v1201, 0
    %v1208 = vsel %vm1203, %v1202, 0
    %1210 = vmatprep.subr.mxu0 0.0
    %1211 = vmatpush1.msra.mxu0 %v1197
    %1212 = vmatprep.subr.mxu0 0.0
    %1213 = vmatpush1.msra.mxu0 %v1198
    %1214 = vmatprep.subr.mxu0 0.0
    %1215 = vmatpush1.msra.mxu0 %v1199
    %1216 = vmatprep.subr.mxu0 0.0
    %1217 = vmatpush1.msra.mxu0 %v1200
    %1218 = vmatprep.subr.mxu0 0.0
    %1219 = vmatpush1.msra.mxu0 0.0
    %1220 = vmatprep.subr.mxu0 0.0
    %1221 = vmatpush1.msra.mxu0 0.0
    %1222 = vmatprep.subr.mxu0 0.0
    %1223 = vmatpush1.msra.mxu0 0.0
    %1224 = vmatprep.subr.mxu0 0.0
    %1225 = vmatpush1.msra.mxu0 0.0
    %1226 = vmatprep.subr.mxu0 0.0
    %1227 = vmatpush1.msra.mxu0 0.0
    %1228 = vmatprep.subr.mxu0 0.0
    %1229 = vmatpush1.msra.mxu0 0.0
    %1230 = vmatprep.subr.mxu0 0.0
    %1231 = vmatpush1.msra.mxu0 0.0
    %1232 = vmatprep.subr.mxu0 0.0
    %1233 = vmatpush1.msra.mxu0 0.0
    %1234 = vmatprep.subr.mxu0 0.0
    %1235 = vmatpush1.msra.mxu0 0.0
    %1236 = vmatprep.subr.mxu0 0.0
    %1237 = vmatpush1.msra.mxu0 0.0
    %1238 = vmatprep.subr.mxu0 0.0
    %1239 = vmatpush1.msra.mxu0 0.0
    %1240 = vmatprep.subr.mxu0 0.0
    %1241 = vmatpush1.msra.mxu0 0.0
    %1242 = vmatprep.subr.mxu0 0.0
    %1243 = vmatpush1.msra.mxu0 0.0
    %1244 = vmatprep.subr.mxu0 0.0
    %1245 = vmatpush1.msra.mxu0 0.0
    %1246 = vmatprep.subr.mxu0 0.0
    %1247 = vmatpush1.msra.mxu0 0.0
    %1248 = vmatprep.subr.mxu0 0.0
    %1249 = vmatpush1.msra.mxu0 0.0
    %1250 = vmatprep.subr.mxu0 0.0
    %1251 = vmatpush1.msra.mxu0 0.0
    %1252 = vmatprep.subr.mxu0 0.0
    %1253 = vmatpush1.msra.mxu0 0.0
    %1254 = vmatprep.subr.mxu0 0.0
    %1255 = vmatpush1.msra.mxu0 0.0
    %1256 = vmatprep.subr.mxu0 0.0
    %1257 = vmatpush1.msra.mxu0 0.0
    %1258 = vmatprep.subr.mxu0 0.0
    %1259 = vmatpush1.msra.mxu0 0.0
    %1260 = vmatprep.subr.mxu0 0.0
    %1261 = vmatpush1.msra.mxu0 0.0
    %1262 = vmatprep.subr.mxu0 0.0
    %1263 = vmatpush1.msra.mxu0 0.0
    %1264 = vmatprep.subr.mxu0 0.0
    %1265 = vmatpush1.msra.mxu0 0.0
    %1266 = vmatprep.subr.mxu0 0.0
    %1267 = vmatpush1.msra.mxu0 0.0
    %1268 = vmatprep.subr.mxu0 0.0
    %1269 = vmatpush1.msra.mxu0 0.0
    %1270 = vmatprep.subr.mxu0 0.0
    %1271 = vmatpush1.msra.mxu0 0.0
    %1272 = vmatprep.subr.mxu0 0.0
    %1273 = vmatpush1.msra.mxu0 0.0
    %1274 = vmatprep.mubr.f32.mxu0 0.0
    %1275 = vmatmul.mubr.f32.gmra.mrb[0].mxu0 %v1205
    %v1276 = vpop.f32.mrb[0].mxu0
    %v1277 = vadd.f32 0.0, %v1276
    %v1278 = vpop.f32.mrb[0].mxu0
    %1279 = vmatprep.mubr.f32.mxu0 0.0
    %1280 = vmatmul.mubr.f32.gmra.mrb[0].mxu0 %v1208
    %v1281 = vpop.f32.mrb[0].mxu0
    %v1282 = vadd.f32 0.0, %v1281
    %v1283 = vpop.f32.mrb[0].mxu0
    %1284 = vdwg.mxu0
    %s1285 = scalar_lea.vmem %s3, 16
    %v1286 = vld [vmem:[%s1285] sm:$0xff]
    %v1287 = vld [vmem:[%s1285 + $0x8] sm:$0xff]
    %v1289 = vsel %vm1203, %v1286, 0
    %v1292 = vsel %vm1203, %v1287, 0
    %1294 = vmatprep.subr.mxu0 0.0
    %1295 = vmatpush1.msra.mxu0 %v1197
    %1296 = vmatprep.subr.mxu0 0.0
    %1297 = vmatpush1.msra.mxu0 %v1198
    %1298 = vmatprep.subr.mxu0 0.0
    %1299 = vmatpush1.msra.mxu0 %v1199
    %1300 = vmatprep.subr.mxu0 0.0
    %1301 = vmatpush1.msra.mxu0 %v1200
    %1302 = vmatprep.subr.mxu0 0.0
    %1303 = vmatpush1.msra.mxu0 0.0
    %1304 = vmatprep.subr.mxu0 0.0
    %1305 = vmatpush1.msra.mxu0 0.0
    %1306 = vmatprep.subr.mxu0 0.0
    %1307 = vmatpush1.msra.mxu0 0.0
    %1308 = vmatprep.subr.mxu0 0.0
    %1309 = vmatpush1.msra.mxu0 0.0
    %1310 = vmatprep.subr.mxu0 0.0
    %1311 = vmatpush1.msra.mxu0 0.0
    %1312 = vmatprep.subr.mxu0 0.0
    %1313 = vmatpush1.msra.mxu0 0.0
    %1314 = vmatprep.subr.mxu0 0.0
    %1315 = vmatpush1.msra.mxu0 0.0
    %1316 = vmatprep.subr.mxu0 0.0
    %1317 = vmatpush1.msra.mxu0 0.0
    %1318 = vmatprep.subr.mxu0 0.0
    %1319 = vmatpush1.msra.mxu0 0.0
    %1320 = vmatprep.subr.mxu0 0.0
    %1321 = vmatpush1.msra.mxu0 0.0
    %1322 = vmatprep.subr.mxu0 0.0
    %1323 = vmatpush1.msra.mxu0 0.0
    %1324 = vmatprep.subr.mxu0 0.0
    %1325 = vmatpush1.msra.mxu0 0.0
    %1326 = vmatprep.subr.mxu0 0.0
    %1327 = vmatpush1.msra.mxu0 0.0
    %1328 = vmatprep.subr.mxu0 0.0
    %1329 = vmatpush1.msra.mxu0 0.0
    %1330 = vmatprep.subr.mxu0 0.0
    %1331 = vmatpush1.msra.mxu0 0.0
    %1332 = vmatprep.subr.mxu0 0.0
    %1333 = vmatpush1.msra.mxu0 0.0
    %1334 = vmatprep.subr.mxu0 0.0
    %1335 = vmatpush1.msra.mxu0 0.0
    %1336 = vmatprep.subr.mxu0 0.0
    %1337 = vmatpush1.msra.mxu0 0.0
    %1338 = vmatprep.subr.mxu0 0.0
    %1339 = vmatpush1.msra.mxu0 0.0
    %1340 = vmatprep.subr.mxu0 0.0
    %1341 = vmatpush1.msra.mxu0 0.0
    %1342 = vmatprep.subr.mxu0 0.0
    %1343 = vmatpush1.msra.mxu0 0.0
    %1344 = vmatprep.subr.mxu0 0.0
    %1345 = vmatpush1.msra.mxu0 0.0
    %1346 = vmatprep.subr.mxu0 0.0
    %1347 = vmatpush1.msra.mxu0 0.0
    %1348 = vmatprep.subr.mxu0 0.0
    %1349 = vmatpush1.msra.mxu0 0.0
    %1350 = vmatprep.subr.mxu0 0.0
    %1351 = vmatpush1.msra.mxu0 0.0
    %1352 = vmatprep.subr.mxu0 0.0
    %1353 = vmatpush1.msra.mxu0 0.0
    %1354 = vmatprep.subr.mxu0 0.0
    %1355 = vmatpush1.msra.mxu0 0.0
    %1356 = vmatprep.subr.mxu0 0.0
    %1357 = vmatpush1.msra.mxu0 0.0
    %1358 = vmatprep.mubr.f32.mxu0 0.0
    %1359 = vmatmul.mubr.f32.gmra.mrb[0].mxu0 %v1289
    %v1360 = vpop.f32.mrb[0].mxu0
    %v1361 = vadd.f32 0.0, %v1360
    %v1362 = vpop.f32.mrb[0].mxu0
    %1363 = vmatprep.mubr.f32.mxu0 0.0
    %1364 = vmatmul.mubr.f32.gmra.mrb[0].mxu0 %v1292
    %v1365 = vpop.f32.mrb[0].mxu0
    %v1366 = vadd.f32 0.0, %v1365
    %v1367 = vpop.f32.mrb[0].mxu0
    %1368 = vdwg.mxu0
    %s1369 = scalar_lea.vmem %s3, 32
    %v1370 = vld [vmem:[%s1369] sm:$0xff]
    %v1371 = vld [vmem:[%s1369 + $0x8] sm:$0xff]
    %v1373 = vsel %vm1203, %v1370, 0
    %v1376 = vsel %vm1203, %v1371, 0
    %1378 = vmatprep.subr.mxu0 0.0
    %1379 = vmatpush1.msra.mxu0 %v1197
    %1380 = vmatprep.subr.mxu0 0.0
    %1381 = vmatpush1.msra.mxu0 %v1198
    %1382 = vmatprep.subr.mxu0 0.0
    %1383 = vmatpush1.msra.mxu0 %v1199
    %1384 = vmatprep.subr.mxu0 0.0
    %1385 = vmatpush1.msra.mxu0 %v1200
    %1386 = vmatprep.subr.mxu0 0.0
    %1387 = vmatpush1.msra.mxu0 0.0
    %1388 = vmatprep.subr.mxu0 0.0
    %1389 = vmatpush1.msra.mxu0 0.0
    %1390 = vmatprep.subr.mxu0 0.0
    %1391 = vmatpush1.msra.mxu0 0.0
    %1392 = vmatprep.subr.mxu0 0.0
    %1393 = vmatpush1.msra.mxu0 0.0
    %1394 = vmatprep.subr.mxu0 0.0
    %1395 = vmatpush1.msra.mxu0 0.0
    %1396 = vmatprep.subr.mxu0 0.0
    %1397 = vmatpush1.msra.mxu0 0.0
    %1398 = vmatprep.subr.mxu0 0.0
    %1399 = vmatpush1.msra.mxu0 0.0
    %1400 = vmatprep.subr.mxu0 0.0
    %1401 = vmatpush1.msra.mxu0 0.0
    %1402 = vmatprep.subr.mxu0 0.0
    %1403 = vmatpush1.msra.mxu0 0.0
    %1404 = vmatprep.subr.mxu0 0.0
    %1405 = vmatpush1.msra.mxu0 0.0
    %1406 = vmatprep.subr.mxu0 0.0
    %1407 = vmatpush1.msra.mxu0 0.0
    %1408 = vmatprep.subr.mxu0 0.0
    %1409 = vmatpush1.msra.mxu0 0.0
    %1410 = vmatprep.subr.mxu0 0.0
    %1411 = vmatpush1.msra.mxu0 0.0
    %1412 = vmatprep.subr.mxu0 0.0
    %1413 = vmatpush1.msra.mxu0 0.0
    %1414 = vmatprep.subr.mxu0 0.0
    %1415 = vmatpush1.msra.mxu0 0.0
    %1416 = vmatprep.subr.mxu0 0.0
    %1417 = vmatpush1.msra.mxu0 0.0
    %1418 = vmatprep.subr.mxu0 0.0
    %1419 = vmatpush1.msra.mxu0 0.0
    %1420 = vmatprep.subr.mxu0 0.0
    %1421 = vmatpush1.msra.mxu0 0.0
    %1422 = vmatprep.subr.mxu0 0.0
    %1423 = vmatpush1.msra.mxu0 0.0
    %1424 = vmatprep.subr.mxu0 0.0
    %1425 = vmatpush1.msra.mxu0 0.0
    %1426 = vmatprep.subr.mxu0 0.0
    %1427 = vmatpush1.msra.mxu0 0.0
    %1428 = vmatprep.subr.mxu0 0.0
    %1429 = vmatpush1.msra.mxu0 0.0
    %1430 = vmatprep.subr.mxu0 0.0
    %1431 = vmatpush1.msra.mxu0 0.0
    %1432 = vmatprep.subr.mxu0 0.0
    %1433 = vmatpush1.msra.mxu0 0.0
    %1434 = vmatprep.subr.mxu0 0.0
    %1435 = vmatpush1.msra.mxu0 0.0
    %1436 = vmatprep.subr.mxu0 0.0
    %1437 = vmatpush1.msra.mxu0 0.0
    %1438 = vmatprep.subr.mxu0 0.0
    %1439 = vmatpush1.msra.mxu0 0.0
    %1440 = vmatprep.subr.mxu0 0.0
    %1441 = vmatpush1.msra.mxu0 0.0
    %1442 = vmatprep.mubr.f32.mxu0 0.0
    %1443 = vmatmul.mubr.f32.gmra.mrb[0].mxu0 %v1373
    %v1444 = vpop.f32.mrb[0].mxu0
    %v1445 = vadd.f32 0.0, %v1444
    %v1446 = vpop.f32.mrb[0].mxu0
    %1447 = vmatprep.mubr.f32.mxu0 0.0
    %1448 = vmatmul.mubr.f32.gmra.mrb[0].mxu0 %v1376
    %v1449 = vpop.f32.mrb[0].mxu0
    %v1450 = vadd.f32 0.0, %v1449
    %v1451 = vpop.f32.mrb[0].mxu0
    %1452 = vdwg.mxu0
    %1455 = vrot.lane.b32.xlu0 %v1361, 16
    %v1456 = vpop.permute.xlu0 %1455
    %1457 = vrot.lane.b32.xlu0 %v1366, 16
    %v1458 = vpop.permute.xlu0 %1457
    %1463 = vrot.lane.b32.xlu0 %v1445, 32
    %v1464 = vpop.permute.xlu0 %1463
    %1465 = vrot.lane.b32.xlu0 %v1450, 32
    %v1466 = vpop.permute.xlu0 %1465
    %v1469 = vsel %vm1083, %v1277, %v1456
    %v1470 = vsel %vm1083, %v1282, %v1458
    %v1471 = vsel %vm1203, %v1469, %v1464
    %v1472 = vsel %vm1203, %v1470, %v1466
    %v1473 = vld [vmem:[%s8] sm:$0xff]
    %v1474 = vld [vmem:[%s8 + $0x8] sm:$0xff]
    %v1475 = vld [vmem:[%s8 + $0x10] sm:$0xff]
    %v1476 = vld [vmem:[%s8 + $0x18] sm:$0xff]
    %v1477 = vld [vmem:[%s8 + $0x20] sm:$0xff]
    %v1478 = vld [vmem:[%s8 + $0x28] sm:$0xff]
    %vm1479 = vcmask 392192
    %v1481 = vsel %vm1479, %v1471, 0
    %v1484 = vsel %vm1479, %v1472, 0
    %1486 = vmatprep.subr.mxu0 0.0
    %1487 = vmatpush1.msra.mxu0 %v1473
    %1488 = vmatprep.subr.mxu0 0.0
    %1489 = vmatpush1.msra.mxu0 %v1474
    %1490 = vmatprep.subr.mxu0 0.0
    %1491 = vmatpush1.msra.mxu0 %v1475
    %1492 = vmatprep.subr.mxu0 0.0
    %1493 = vmatpush1.msra.mxu0 %v1476
    %1494 = vmatprep.subr.mxu0 0.0
    %1495 = vmatpush1.msra.mxu0 %v1477
    %1496 = vmatprep.subr.mxu0 0.0
    %1497 = vmatpush1.msra.mxu0 %v1478
    %1498 = vmatprep.subr.mxu0 0.0
    %1499 = vmatpush1.msra.mxu0 0.0
    %1500 = vmatprep.subr.mxu0 0.0
    %1501 = vmatpush1.msra.mxu0 0.0
    %1502 = vmatprep.subr.mxu0 0.0
    %1503 = vmatpush1.msra.mxu0 0.0
    %1504 = vmatprep.subr.mxu0 0.0
    %1505 = vmatpush1.msra.mxu0 0.0
    %1506 = vmatprep.subr.mxu0 0.0
    %1507 = vmatpush1.msra.mxu0 0.0
    %1508 = vmatprep.subr.mxu0 0.0
    %1509 = vmatpush1.msra.mxu0 0.0
    %1510 = vmatprep.subr.mxu0 0.0
    %1511 = vmatpush1.msra.mxu0 0.0
    %1512 = vmatprep.subr.mxu0 0.0
    %1513 = vmatpush1.msra.mxu0 0.0
    %1514 = vmatprep.subr.mxu0 0.0
    %1515 = vmatpush1.msra.mxu0 0.0
    %1516 = vmatprep.subr.mxu0 0.0
    %1517 = vmatpush1.msra.mxu0 0.0
    %1518 = vmatprep.subr.mxu0 0.0
    %1519 = vmatpush1.msra.mxu0 0.0
    %1520 = vmatprep.subr.mxu0 0.0
    %1521 = vmatpush1.msra.mxu0 0.0
    %1522 = vmatprep.subr.mxu0 0.0
    %1523 = vmatpush1.msra.mxu0 0.0
    %1524 = vmatprep.subr.mxu0 0.0
    %1525 = vmatpush1.msra.mxu0 0.0
    %1526 = vmatprep.subr.mxu0 0.0
    %1527 = vmatpush1.msra.mxu0 0.0
    %1528 = vmatprep.subr.mxu0 0.0
    %1529 = vmatpush1.msra.mxu0 0.0
    %1530 = vmatprep.subr.mxu0 0.0
    %1531 = vmatpush1.msra.mxu0 0.0
    %1532 = vmatprep.subr.mxu0 0.0
    %1533 = vmatpush1.msra.mxu0 0.0
    %1534 = vmatprep.subr.mxu0 0.0
    %1535 = vmatpush1.msra.mxu0 0.0
    %1536 = vmatprep.subr.mxu0 0.0
    %1537 = vmatpush1.msra.mxu0 0.0
    %1538 = vmatprep.subr.mxu0 0.0
    %1539 = vmatpush1.msra.mxu0 0.0
    %1540 = vmatprep.subr.mxu0 0.0
    %1541 = vmatpush1.msra.mxu0 0.0
    %1542 = vmatprep.subr.mxu0 0.0
    %1543 = vmatpush1.msra.mxu0 0.0
    %1544 = vmatprep.subr.mxu0 0.0
    %1545 = vmatpush1.msra.mxu0 0.0
    %1546 = vmatprep.subr.mxu0 0.0
    %1547 = vmatpush1.msra.mxu0 0.0
    %1548 = vmatprep.subr.mxu0 0.0
    %1549 = vmatpush1.msra.mxu0 0.0
    %1550 = vmatprep.mubr.f32.mxu0 0.0
    %1551 = vmatmul.mubr.f32.gmra.mrb[0].mxu0 %v1481
    %v1552 = vpop.f32.mrb[0].mxu0
    %v1553 = vadd.f32 0.0, %v1552
    %v1554 = vpop.f32.mrb[0].mxu0
    %1555 = vmatprep.mubr.f32.mxu0 0.0
    %1556 = vmatmul.mubr.f32.gmra.mrb[0].mxu0 %v1484
    %v1557 = vpop.f32.mrb[0].mxu0
    %v1558 = vadd.f32 0.0, %v1557
    %v1559 = vpop.f32.mrb[0].mxu0
    %1560 = vdwg.mxu0
    %vm1561 = vcmp.gt.f32.partialorder %v1553, 0.0
    %vm1562 = vcmp.gt.f32.partialorder %v1558, 0.0
    %v1563 = vmul.f32 %v1553, 0.2
    %v1564 = vmul.f32 %v1558, 0.2
    %v1565 = vsel %vm1561, %v1553, %v1563
    %v1566 = vsel %vm1562, %v1558, %v1564
    %v1567 = vld [vmem:[#allocation2] sm:$0xff]
    %v1569 = vsel %vm1083, %v1567, 0
    %1571 = vmatprep.subr.mxu0 0.0
    %1572 = vmatpush1.msra.mxu0 %v1565
    %1573 = vmatprep.subr.mxu0 0.0
    %1574 = vmatpush1.msra.mxu0 %v1566
    %1575 = vmatprep.subr.mxu0 0.0
    %1576 = vmatpush1.msra.mxu0 0.0
    %1577 = vmatprep.subr.mxu0 0.0
    %1578 = vmatpush1.msra.mxu0 0.0
    %1579 = vmatprep.subr.mxu0 0.0
    %1580 = vmatpush1.msra.mxu0 0.0
    %1581 = vmatprep.subr.mxu0 0.0
    %1582 = vmatpush1.msra.mxu0 0.0
    %1583 = vmatprep.subr.mxu0 0.0
    %1584 = vmatpush1.msra.mxu0 0.0
    %1585 = vmatprep.subr.mxu0 0.0
    %1586 = vmatpush1.msra.mxu0 0.0
    %1587 = vmatprep.subr.mxu0 0.0
    %1588 = vmatpush1.msra.mxu0 0.0
    %1589 = vmatprep.subr.mxu0 0.0
    %1590 = vmatpush1.msra.mxu0 0.0
    %1591 = vmatprep.subr.mxu0 0.0
    %1592 = vmatpush1.msra.mxu0 0.0
    %1593 = vmatprep.subr.mxu0 0.0
    %1594 = vmatpush1.msra.mxu0 0.0
    %1595 = vmatprep.subr.mxu0 0.0
    %1596 = vmatpush1.msra.mxu0 0.0
    %1597 = vmatprep.subr.mxu0 0.0
    %1598 = vmatpush1.msra.mxu0 0.0
    %1599 = vmatprep.subr.mxu0 0.0
    %1600 = vmatpush1.msra.mxu0 0.0
    %1601 = vmatprep.subr.mxu0 0.0
    %1602 = vmatpush1.msra.mxu0 0.0
    %1603 = vmatprep.subr.mxu0 0.0
    %1604 = vmatpush1.msra.mxu0 0.0
    %1605 = vmatprep.subr.mxu0 0.0
    %1606 = vmatpush1.msra.mxu0 0.0
    %1607 = vmatprep.subr.mxu0 0.0
    %1608 = vmatpush1.msra.mxu0 0.0
    %1609 = vmatprep.subr.mxu0 0.0
    %1610 = vmatpush1.msra.mxu0 0.0
    %1611 = vmatprep.subr.mxu0 0.0
    %1612 = vmatpush1.msra.mxu0 0.0
    %1613 = vmatprep.subr.mxu0 0.0
    %1614 = vmatpush1.msra.mxu0 0.0
    %1615 = vmatprep.subr.mxu0 0.0
    %1616 = vmatpush1.msra.mxu0 0.0
    %1617 = vmatprep.subr.mxu0 0.0
    %1618 = vmatpush1.msra.mxu0 0.0
    %1619 = vmatprep.subr.mxu0 0.0
    %1620 = vmatpush1.msra.mxu0 0.0
    %1621 = vmatprep.subr.mxu0 0.0
    %1622 = vmatpush1.msra.mxu0 0.0
    %1623 = vmatprep.subr.mxu0 0.0
    %1624 = vmatpush1.msra.mxu0 0.0
    %1625 = vmatprep.subr.mxu0 0.0
    %1626 = vmatpush1.msra.mxu0 0.0
    %1627 = vmatprep.subr.mxu0 0.0
    %1628 = vmatpush1.msra.mxu0 0.0
    %1629 = vmatprep.subr.mxu0 0.0
    %1630 = vmatpush1.msra.mxu0 0.0
    %1631 = vmatprep.subr.mxu0 0.0
    %1632 = vmatpush1.msra.mxu0 0.0
    %1633 = vmatprep.subr.mxu0 0.0
    %1634 = vmatpush1.msra.mxu0 0.0
    %1635 = vmatprep.mubr.f32.mxu0 0.0
    %1636 = vmatmul.mubr.f32.gmra.mrb[0].mxu0 %v1569
    %v1637 = vpop.f32.mrb[0].mxu0
    %v1638 = vadd.f32 0.0, %v1637
    %v1639 = vpop.f32.mrb[0].mxu0
    %1640 = vdwg.mxu0
    %s1641 = scalar_lea.vmem [#allocation2], 8
    %v1642 = vld [vmem:[%s1641] sm:$0xff]
    %v1644 = vsel %vm1083, %v1642, 0
    %1646 = vmatprep.subr.mxu0 0.0
    %1647 = vmatpush1.msra.mxu0 %v1565
    %1648 = vmatprep.subr.mxu0 0.0
    %1649 = vmatpush1.msra.mxu0 %v1566
    %1650 = vmatprep.subr.mxu0 0.0
    %1651 = vmatpush1.msra.mxu0 0.0
    %1652 = vmatprep.subr.mxu0 0.0
    %1653 = vmatpush1.msra.mxu0 0.0
    %1654 = vmatprep.subr.mxu0 0.0
    %1655 = vmatpush1.msra.mxu0 0.0
    %1656 = vmatprep.subr.mxu0 0.0
    %1657 = vmatpush1.msra.mxu0 0.0
    %1658 = vmatprep.subr.mxu0 0.0
    %1659 = vmatpush1.msra.mxu0 0.0
    %1660 = vmatprep.subr.mxu0 0.0
    %1661 = vmatpush1.msra.mxu0 0.0
    %1662 = vmatprep.subr.mxu0 0.0
    %1663 = vmatpush1.msra.mxu0 0.0
    %1664 = vmatprep.subr.mxu0 0.0
    %1665 = vmatpush1.msra.mxu0 0.0
    %1666 = vmatprep.subr.mxu0 0.0
    %1667 = vmatpush1.msra.mxu0 0.0
    %1668 = vmatprep.subr.mxu0 0.0
    %1669 = vmatpush1.msra.mxu0 0.0
    %1670 = vmatprep.subr.mxu0 0.0
    %1671 = vmatpush1.msra.mxu0 0.0
    %1672 = vmatprep.subr.mxu0 0.0
    %1673 = vmatpush1.msra.mxu0 0.0
    %1674 = vmatprep.subr.mxu0 0.0
    %1675 = vmatpush1.msra.mxu0 0.0
    %1676 = vmatprep.subr.mxu0 0.0
    %1677 = vmatpush1.msra.mxu0 0.0
    %1678 = vmatprep.subr.mxu0 0.0
    %1679 = vmatpush1.msra.mxu0 0.0
    %1680 = vmatprep.subr.mxu0 0.0
    %1681 = vmatpush1.msra.mxu0 0.0
    %1682 = vmatprep.subr.mxu0 0.0
    %1683 = vmatpush1.msra.mxu0 0.0
    %1684 = vmatprep.subr.mxu0 0.0
    %1685 = vmatpush1.msra.mxu0 0.0
    %1686 = vmatprep.subr.mxu0 0.0
    %1687 = vmatpush1.msra.mxu0 0.0
    %1688 = vmatprep.subr.mxu0 0.0
    %1689 = vmatpush1.msra.mxu0 0.0
    %1690 = vmatprep.subr.mxu0 0.0
    %1691 = vmatpush1.msra.mxu0 0.0
    %1692 = vmatprep.subr.mxu0 0.0
    %1693 = vmatpush1.msra.mxu0 0.0
    %1694 = vmatprep.subr.mxu0 0.0
    %1695 = vmatpush1.msra.mxu0 0.0
    %1696 = vmatprep.subr.mxu0 0.0
    %1697 = vmatpush1.msra.mxu0 0.0
    %1698 = vmatprep.subr.mxu0 0.0
    %1699 = vmatpush1.msra.mxu0 0.0
    %1700 = vmatprep.subr.mxu0 0.0
    %1701 = vmatpush1.msra.mxu0 0.0
    %1702 = vmatprep.subr.mxu0 0.0
    %1703 = vmatpush1.msra.mxu0 0.0
    %1704 = vmatprep.subr.mxu0 0.0
    %1705 = vmatpush1.msra.mxu0 0.0
    %1706 = vmatprep.subr.mxu0 0.0
    %1707 = vmatpush1.msra.mxu0 0.0
    %1708 = vmatprep.subr.mxu0 0.0
    %1709 = vmatpush1.msra.mxu0 0.0
    %1710 = vmatprep.mubr.f32.mxu0 0.0
    %1711 = vmatmul.mubr.f32.gmra.mrb[0].mxu0 %v1644
    %v1712 = vpop.f32.mrb[0].mxu0
    %v1713 = vadd.f32 0.0, %v1712
    %v1714 = vpop.f32.mrb[0].mxu0
    %1715 = vdwg.mxu0
    %s1716 = scalar_lea.vmem [#allocation2], 16
    %v1717 = vld [vmem:[%s1716] sm:$0xff]
    %v1719 = vsel %vm1083, %v1717, 0
    %1721 = vmatprep.subr.mxu0 0.0
    %1722 = vmatpush1.msra.mxu0 %v1565
    %1723 = vmatprep.subr.mxu0 0.0
    %1724 = vmatpush1.msra.mxu0 %v1566
    %1725 = vmatprep.subr.mxu0 0.0
    %1726 = vmatpush1.msra.mxu0 0.0
    %1727 = vmatprep.subr.mxu0 0.0
    %1728 = vmatpush1.msra.mxu0 0.0
    %1729 = vmatprep.subr.mxu0 0.0
    %1730 = vmatpush1.msra.mxu0 0.0
    %1731 = vmatprep.subr.mxu0 0.0
    %1732 = vmatpush1.msra.mxu0 0.0
    %1733 = vmatprep.subr.mxu0 0.0
    %1734 = vmatpush1.msra.mxu0 0.0
    %1735 = vmatprep.subr.mxu0 0.0
    %1736 = vmatpush1.msra.mxu0 0.0
    %1737 = vmatprep.subr.mxu0 0.0
    %1738 = vmatpush1.msra.mxu0 0.0
    %1739 = vmatprep.subr.mxu0 0.0
    %1740 = vmatpush1.msra.mxu0 0.0
    %1741 = vmatprep.subr.mxu0 0.0
    %1742 = vmatpush1.msra.mxu0 0.0
    %1743 = vmatprep.subr.mxu0 0.0
    %1744 = vmatpush1.msra.mxu0 0.0
    %1745 = vmatprep.subr.mxu0 0.0
    %1746 = vmatpush1.msra.mxu0 0.0
    %1747 = vmatprep.subr.mxu0 0.0
    %1748 = vmatpush1.msra.mxu0 0.0
    %1749 = vmatprep.subr.mxu0 0.0
    %1750 = vmatpush1.msra.mxu0 0.0
    %1751 = vmatprep.subr.mxu0 0.0
    %1752 = vmatpush1.msra.mxu0 0.0
    %1753 = vmatprep.subr.mxu0 0.0
    %1754 = vmatpush1.msra.mxu0 0.0
    %1755 = vmatprep.subr.mxu0 0.0
    %1756 = vmatpush1.msra.mxu0 0.0
    %1757 = vmatprep.subr.mxu0 0.0
    %1758 = vmatpush1.msra.mxu0 0.0
    %1759 = vmatprep.subr.mxu0 0.0
    %1760 = vmatpush1.msra.mxu0 0.0
    %1761 = vmatprep.subr.mxu0 0.0
    %1762 = vmatpush1.msra.mxu0 0.0
    %1763 = vmatprep.subr.mxu0 0.0
    %1764 = vmatpush1.msra.mxu0 0.0
    %1765 = vmatprep.subr.mxu0 0.0
    %1766 = vmatpush1.msra.mxu0 0.0
    %1767 = vmatprep.subr.mxu0 0.0
    %1768 = vmatpush1.msra.mxu0 0.0
    %1769 = vmatprep.subr.mxu0 0.0
    %1770 = vmatpush1.msra.mxu0 0.0
    %1771 = vmatprep.subr.mxu0 0.0
    %1772 = vmatpush1.msra.mxu0 0.0
    %1773 = vmatprep.subr.mxu0 0.0
    %1774 = vmatpush1.msra.mxu0 0.0
    %1775 = vmatprep.subr.mxu0 0.0
    %1776 = vmatpush1.msra.mxu0 0.0
    %1777 = vmatprep.subr.mxu0 0.0
    %1778 = vmatpush1.msra.mxu0 0.0
    %1779 = vmatprep.subr.mxu0 0.0
    %1780 = vmatpush1.msra.mxu0 0.0
    %1781 = vmatprep.subr.mxu0 0.0
    %1782 = vmatpush1.msra.mxu0 0.0
    %1783 = vmatprep.subr.mxu0 0.0
    %1784 = vmatpush1.msra.mxu0 0.0
    %1785 = vmatprep.mubr.f32.mxu0 0.0
    %1786 = vmatmul.mubr.f32.gmra.mrb[0].mxu0 %v1719
    %v1787 = vpop.f32.mrb[0].mxu0
    %v1788 = vadd.f32 0.0, %v1787
    %v1789 = vpop.f32.mrb[0].mxu0
    %1790 = vdwg.mxu0
    %1792 = vrot.lane.b32.xlu0 %v1713, 16
    %v1793 = vpop.permute.xlu0 %1792
    %1796 = vrot.lane.b32.xlu0 %v1788, 32
    %v1797 = vpop.permute.xlu0 %1796
    %v1799 = vsel %vm1083, %v1638, %v1793
    %v1800 = vsel %vm1203, %v1799, %v1797
    %v1801 = vld [vmem:[%s9] sm:$0xff]
    %v1802 = vld [vmem:[%s9 + $0x8] sm:$0xff]
    %v1803 = vld [vmem:[%s9 + $0x10] sm:$0xff]
    %v1804 = vld [vmem:[%s9 + $0x18] sm:$0xff]
    %v1805 = vld [vmem:[%s9 + $0x20] sm:$0xff]
    %v1806 = vld [vmem:[%s9 + $0x28] sm:$0xff]
    %v1808 = vsel %vm1479, %v1800, 0
    %1810 = vmatprep.subr.mxu0 0.0
    %1811 = vmatpush1.msra.mxu0 %v1801
    %1812 = vmatprep.subr.mxu0 0.0
    %1813 = vmatpush1.msra.mxu0 %v1802
    %1814 = vmatprep.subr.mxu0 0.0
    %1815 = vmatpush1.msra.mxu0 %v1803
    %1816 = vmatprep.subr.mxu0 0.0
    %1817 = vmatpush1.msra.mxu0 %v1804
    %1818 = vmatprep.subr.mxu0 0.0
    %1819 = vmatpush1.msra.mxu0 %v1805
    %1820 = vmatprep.subr.mxu0 0.0
    %1821 = vmatpush1.msra.mxu0 %v1806
    %1822 = vmatprep.subr.mxu0 0.0
    %1823 = vmatpush1.msra.mxu0 0.0
    %1824 = vmatprep.subr.mxu0 0.0
    %1825 = vmatpush1.msra.mxu0 0.0
    %1826 = vmatprep.subr.mxu0 0.0
    %1827 = vmatpush1.msra.mxu0 0.0
    %1828 = vmatprep.subr.mxu0 0.0
    %1829 = vmatpush1.msra.mxu0 0.0
    %1830 = vmatprep.subr.mxu0 0.0
    %1831 = vmatpush1.msra.mxu0 0.0
    %1832 = vmatprep.subr.mxu0 0.0
    %1833 = vmatpush1.msra.mxu0 0.0
    %1834 = vmatprep.subr.mxu0 0.0
    %1835 = vmatpush1.msra.mxu0 0.0
    %1836 = vmatprep.subr.mxu0 0.0
    %1837 = vmatpush1.msra.mxu0 0.0
    %1838 = vmatprep.subr.mxu0 0.0
    %1839 = vmatpush1.msra.mxu0 0.0
    %1840 = vmatprep.subr.mxu0 0.0
    %1841 = vmatpush1.msra.mxu0 0.0
    %1842 = vmatprep.subr.mxu0 0.0
    %1843 = vmatpush1.msra.mxu0 0.0
    %1844 = vmatprep.subr.mxu0 0.0
    %1845 = vmatpush1.msra.mxu0 0.0
    %1846 = vmatprep.subr.mxu0 0.0
    %1847 = vmatpush1.msra.mxu0 0.0
    %1848 = vmatprep.subr.mxu0 0.0
    %1849 = vmatpush1.msra.mxu0 0.0
    %1850 = vmatprep.subr.mxu0 0.0
    %1851 = vmatpush1.msra.mxu0 0.0
    %1852 = vmatprep.subr.mxu0 0.0
    %1853 = vmatpush1.msra.mxu0 0.0
    %1854 = vmatprep.subr.mxu0 0.0
    %1855 = vmatpush1.msra.mxu0 0.0
    %1856 = vmatprep.subr.mxu0 0.0
    %1857 = vmatpush1.msra.mxu0 0.0
    %1858 = vmatprep.subr.mxu0 0.0
    %1859 = vmatpush1.msra.mxu0 0.0
    %1860 = vmatprep.subr.mxu0 0.0
    %1861 = vmatpush1.msra.mxu0 0.0
    %1862 = vmatprep.subr.mxu0 0.0
    %1863 = vmatpush1.msra.mxu0 0.0
    %1864 = vmatprep.subr.mxu0 0.0
    %1865 = vmatpush1.msra.mxu0 0.0
    %1866 = vmatprep.subr.mxu0 0.0
    %1867 = vmatpush1.msra.mxu0 0.0
    %1868 = vmatprep.subr.mxu0 0.0
    %1869 = vmatpush1.msra.mxu0 0.0
    %1870 = vmatprep.subr.mxu0 0.0
    %1871 = vmatpush1.msra.mxu0 0.0
    %1872 = vmatprep.subr.mxu0 0.0
    %1873 = vmatpush1.msra.mxu0 0.0
    %1874 = vmatprep.mubr.f32.mxu0 0.0
    %1875 = vmatmul.mubr.f32.gmra.mrb[0].mxu0 %v1808
    %v1876 = vpop.f32.mrb[0].mxu0
    %v1877 = vadd.f32 0.0, %v1876
    %v1878 = vpop.f32.mrb[0].mxu0
    %1879 = vdwg.mxu0
    %vm1880 = vcmp.gt.f32.partialorder %v1877, 0.0
    %v1881 = vmul.f32 %v1877, 0.2
    %v1882 = vsel %vm1880, %v1877, %v1881
    %v1883 = vld [vmem:[#allocation5] sm:$0x3]
    %v1885 = vsel %vm1078, %v1883, 0
    %1887 = vmatprep.subr.mxu0 0.0
    %1888 = vmatpush1.msra.mxu0 %v1882
    %1889 = vmatprep.subr.mxu0 0.0
    %1890 = vmatpush1.msra.mxu0 0.0
    %1891 = vmatprep.subr.mxu0 0.0
    %1892 = vmatpush1.msra.mxu0 0.0
    %1893 = vmatprep.subr.mxu0 0.0
    %1894 = vmatpush1.msra.mxu0 0.0
    %1895 = vmatprep.subr.mxu0 0.0
    %1896 = vmatpush1.msra.mxu0 0.0
    %1897 = vmatprep.subr.mxu0 0.0
    %1898 = vmatpush1.msra.mxu0 0.0
    %1899 = vmatprep.subr.mxu0 0.0
    %1900 = vmatpush1.msra.mxu0 0.0
    %1901 = vmatprep.subr.mxu0 0.0
    %1902 = vmatpush1.msra.mxu0 0.0
    %1903 = vmatprep.subr.mxu0 0.0
    %1904 = vmatpush1.msra.mxu0 0.0
    %1905 = vmatprep.subr.mxu0 0.0
    %1906 = vmatpush1.msra.mxu0 0.0
    %1907 = vmatprep.subr.mxu0 0.0
    %1908 = vmatpush1.msra.mxu0 0.0
    %1909 = vmatprep.subr.mxu0 0.0
    %1910 = vmatpush1.msra.mxu0 0.0
    %1911 = vmatprep.subr.mxu0 0.0
    %1912 = vmatpush1.msra.mxu0 0.0
    %1913 = vmatprep.subr.mxu0 0.0
    %1914 = vmatpush1.msra.mxu0 0.0
    %1915 = vmatprep.subr.mxu0 0.0
    %1916 = vmatpush1.msra.mxu0 0.0
    %1917 = vmatprep.subr.mxu0 0.0
    %1918 = vmatpush1.msra.mxu0 0.0
    %1919 = vmatprep.subr.mxu0 0.0
    %1920 = vmatpush1.msra.mxu0 0.0
    %1921 = vmatprep.subr.mxu0 0.0
    %1922 = vmatpush1.msra.mxu0 0.0
    %1923 = vmatprep.subr.mxu0 0.0
    %1924 = vmatpush1.msra.mxu0 0.0
    %1925 = vmatprep.subr.mxu0 0.0
    %1926 = vmatpush1.msra.mxu0 0.0
    %1927 = vmatprep.subr.mxu0 0.0
    %1928 = vmatpush1.msra.mxu0 0.0
    %1929 = vmatprep.subr.mxu0 0.0
    %1930 = vmatpush1.msra.mxu0 0.0
    %1931 = vmatprep.subr.mxu0 0.0
    %1932 = vmatpush1.msra.mxu0 0.0
    %1933 = vmatprep.subr.mxu0 0.0
    %1934 = vmatpush1.msra.mxu0 0.0
    %1935 = vmatprep.subr.mxu0 0.0
    %1936 = vmatpush1.msra.mxu0 0.0
    %1937 = vmatprep.subr.mxu0 0.0
    %1938 = vmatpush1.msra.mxu0 0.0
    %1939 = vmatprep.subr.mxu0 0.0
    %1940 = vmatpush1.msra.mxu0 0.0
    %1941 = vmatprep.subr.mxu0 0.0
    %1942 = vmatpush1.msra.mxu0 0.0
    %1943 = vmatprep.subr.mxu0 0.0
    %1944 = vmatpush1.msra.mxu0 0.0
    %1945 = vmatprep.subr.mxu0 0.0
    %1946 = vmatpush1.msra.mxu0 0.0
    %1947 = vmatprep.subr.mxu0 0.0
    %1948 = vmatpush1.msra.mxu0 0.0
    %1949 = vmatprep.subr.mxu0 0.0
    %1950 = vmatpush1.msra.mxu0 0.0
    %1951 = vmatprep.mubr.f32.mxu0 0.0
    %1952 = vmatmul.mubr.f32.gmra.mrb[0].mxu0 %v1885
    %v1953 = vpop.f32.mrb[0].mxu0
    %v1954 = vadd.f32 0.0, %v1953
    %v1955 = vpop.f32.mrb[0].mxu0
    %1956 = vdwg.mxu0
    %s1957 = scalar_lea.vmem [#allocation5], 2
    %v1958 = vld [vmem:[%s1957] sm:$0x3]
    %v1960 = vsel %vm1078, %v1958, 0
    %1962 = vmatprep.subr.mxu0 0.0
    %1963 = vmatpush1.msra.mxu0 %v1882
    %1964 = vmatprep.subr.mxu0 0.0
    %1965 = vmatpush1.msra.mxu0 0.0
    %1966 = vmatprep.subr.mxu0 0.0
    %1967 = vmatpush1.msra.mxu0 0.0
    %1968 = vmatprep.subr.mxu0 0.0
    %1969 = vmatpush1.msra.mxu0 0.0
    %1970 = vmatprep.subr.mxu0 0.0
    %1971 = vmatpush1.msra.mxu0 0.0
    %1972 = vmatprep.subr.mxu0 0.0
    %1973 = vmatpush1.msra.mxu0 0.0
    %1974 = vmatprep.subr.mxu0 0.0
    %1975 = vmatpush1.msra.mxu0 0.0
    %1976 = vmatprep.subr.mxu0 0.0
    %1977 = vmatpush1.msra.mxu0 0.0
    %1978 = vmatprep.subr.mxu0 0.0
    %1979 = vmatpush1.msra.mxu0 0.0
    %1980 = vmatprep.subr.mxu0 0.0
    %1981 = vmatpush1.msra.mxu0 0.0
    %1982 = vmatprep.subr.mxu0 0.0
    %1983 = vmatpush1.msra.mxu0 0.0
    %1984 = vmatprep.subr.mxu0 0.0
    %1985 = vmatpush1.msra.mxu0 0.0
    %1986 = vmatprep.subr.mxu0 0.0
    %1987 = vmatpush1.msra.mxu0 0.0
    %1988 = vmatprep.subr.mxu0 0.0
    %1989 = vmatpush1.msra.mxu0 0.0
    %1990 = vmatprep.subr.mxu0 0.0
    %1991 = vmatpush1.msra.mxu0 0.0
    %1992 = vmatprep.subr.mxu0 0.0
    %1993 = vmatpush1.msra.mxu0 0.0
    %1994 = vmatprep.subr.mxu0 0.0
    %1995 = vmatpush1.msra.mxu0 0.0
    %1996 = vmatprep.subr.mxu0 0.0
    %1997 = vmatpush1.msra.mxu0 0.0
    %1998 = vmatprep.subr.mxu0 0.0
    %1999 = vmatpush1.msra.mxu0 0.0
    %2000 = vmatprep.subr.mxu0 0.0
    %2001 = vmatpush1.msra.mxu0 0.0
    %2002 = vmatprep.subr.mxu0 0.0
    %2003 = vmatpush1.msra.mxu0 0.0
    %2004 = vmatprep.subr.mxu0 0.0
    %2005 = vmatpush1.msra.mxu0 0.0
    %2006 = vmatprep.subr.mxu0 0.0
    %2007 = vmatpush1.msra.mxu0 0.0
    %2008 = vmatprep.subr.mxu0 0.0
    %2009 = vmatpush1.msra.mxu0 0.0
    %2010 = vmatprep.subr.mxu0 0.0
    %2011 = vmatpush1.msra.mxu0 0.0
    %2012 = vmatprep.subr.mxu0 0.0
    %2013 = vmatpush1.msra.mxu0 0.0
    %2014 = vmatprep.subr.mxu0 0.0
    %2015 = vmatpush1.msra.mxu0 0.0
    %2016 = vmatprep.subr.mxu0 0.0
    %2017 = vmatpush1.msra.mxu0 0.0
    %2018 = vmatprep.subr.mxu0 0.0
    %2019 = vmatpush1.msra.mxu0 0.0
    %2020 = vmatprep.subr.mxu0 0.0
    %2021 = vmatpush1.msra.mxu0 0.0
    %2022 = vmatprep.subr.mxu0 0.0
    %2023 = vmatpush1.msra.mxu0 0.0
    %2024 = vmatprep.subr.mxu0 0.0
    %2025 = vmatpush1.msra.mxu0 0.0
    %2026 = vmatprep.mubr.f32.mxu0 0.0
    %2027 = vmatmul.mubr.f32.gmra.mrb[0].mxu0 %v1960
    %v2028 = vpop.f32.mrb[0].mxu0
    %v2029 = vadd.f32 0.0, %v2028
    %v2030 = vpop.f32.mrb[0].mxu0
    %2031 = vdwg.mxu0
    %2033 = vrot.lane.b32.xlu0 %v2029, 32
    %v2034 = vpop.permute.xlu0 %2033
    %v2036 = vsel %vm1203, %v1954, %v2034
    %v2037 = vld [vmem:[%s10] sm:$0xff]
    %v2038 = vld [vmem:[%s10 + $0x8] sm:$0xff]
    %v2039 = vld [vmem:[%s10 + $0x10] sm:$0xff]
    %v2040 = vld [vmem:[%s10 + $0x18] sm:$0xff]
    %v2041 = vld [vmem:[%s10 + $0x20] sm:$0xff]
    %v2042 = vld [vmem:[%s10 + $0x28] sm:$0xff]
    %v2043 = vld [vmem:[%s10 + $0x30] sm:$0xff]
    %v2044 = vld [vmem:[%s10 + $0x38] sm:$0xff]
    %v2046 = vsel %vm94, %v2036, 0
    %2048 = vmatprep.subr.mxu0 0.0
    %2049 = vmatpush1.msra.mxu0 %v2037
    %2050 = vmatprep.subr.mxu0 0.0
    %2051 = vmatpush1.msra.mxu0 %v2038
    %2052 = vmatprep.subr.mxu0 0.0
    %2053 = vmatpush1.msra.mxu0 %v2039
    %2054 = vmatprep.subr.mxu0 0.0
    %2055 = vmatpush1.msra.mxu0 %v2040
    %2056 = vmatprep.subr.mxu0 0.0
    %2057 = vmatpush1.msra.mxu0 %v2041
    %2058 = vmatprep.subr.mxu0 0.0
    %2059 = vmatpush1.msra.mxu0 %v2042
    %2060 = vmatprep.subr.mxu0 0.0
    %2061 = vmatpush1.msra.mxu0 %v2043
    %2062 = vmatprep.subr.mxu0 0.0
    %2063 = vmatpush1.msra.mxu0 %v2044
    %2064 = vmatprep.subr.mxu0 0.0
    %2065 = vmatpush1.msra.mxu0 0.0
    %2066 = vmatprep.subr.mxu0 0.0
    %2067 = vmatpush1.msra.mxu0 0.0
    %2068 = vmatprep.subr.mxu0 0.0
    %2069 = vmatpush1.msra.mxu0 0.0
    %2070 = vmatprep.subr.mxu0 0.0
    %2071 = vmatpush1.msra.mxu0 0.0
    %2072 = vmatprep.subr.mxu0 0.0
    %2073 = vmatpush1.msra.mxu0 0.0
    %2074 = vmatprep.subr.mxu0 0.0
    %2075 = vmatpush1.msra.mxu0 0.0
    %2076 = vmatprep.subr.mxu0 0.0
    %2077 = vmatpush1.msra.mxu0 0.0
    %2078 = vmatprep.subr.mxu0 0.0
    %2079 = vmatpush1.msra.mxu0 0.0
    %2080 = vmatprep.subr.mxu0 0.0
    %2081 = vmatpush1.msra.mxu0 0.0
    %2082 = vmatprep.subr.mxu0 0.0
    %2083 = vmatpush1.msra.mxu0 0.0
    %2084 = vmatprep.subr.mxu0 0.0
    %2085 = vmatpush1.msra.mxu0 0.0
    %2086 = vmatprep.subr.mxu0 0.0
    %2087 = vmatpush1.msra.mxu0 0.0
    %2088 = vmatprep.subr.mxu0 0.0
    %2089 = vmatpush1.msra.mxu0 0.0
    %2090 = vmatprep.subr.mxu0 0.0
    %2091 = vmatpush1.msra.mxu0 0.0
    %2092 = vmatprep.subr.mxu0 0.0
    %2093 = vmatpush1.msra.mxu0 0.0
    %2094 = vmatprep.subr.mxu0 0.0
    %2095 = vmatpush1.msra.mxu0 0.0
    %2096 = vmatprep.subr.mxu0 0.0
    %2097 = vmatpush1.msra.mxu0 0.0
    %2098 = vmatprep.subr.mxu0 0.0
    %2099 = vmatpush1.msra.mxu0 0.0
    %2100 = vmatprep.subr.mxu0 0.0
    %2101 = vmatpush1.msra.mxu0 0.0
    %2102 = vmatprep.subr.mxu0 0.0
    %2103 = vmatpush1.msra.mxu0 0.0
    %2104 = vmatprep.subr.mxu0 0.0
    %2105 = vmatpush1.msra.mxu0 0.0
    %2106 = vmatprep.subr.mxu0 0.0
    %2107 = vmatpush1.msra.mxu0 0.0
    %2108 = vmatprep.subr.mxu0 0.0
    %2109 = vmatpush1.msra.mxu0 0.0
    %2110 = vmatprep.subr.mxu0 0.0
    %2111 = vmatpush1.msra.mxu0 0.0
    %2112 = vmatprep.mubr.f32.mxu0 0.0
    %2113 = vmatmul.mubr.f32.gmra.mrb[0].mxu0 %v2046
    %v2114 = vpop.f32.mrb[0].mxu0
    %v2115 = vadd.f32 0.0, %v2114
    %v2116 = vpop.f32.mrb[0].mxu0
    %2117 = vdwg.mxu0
    %vm2118 = vcmask 254976
    %2119 = vst.msk [vmem:[#allocation8] sm:$0x3] %vm2118, %v2115
    // Predicated region
    $region58: #{encoder_forward.1} parent=1 // pred_check
      _
    $region59: #{encoder_forward.1} parent=1 // pred_check_branch
      %2121 = sbr.rel (0) target = $region61
    $region60: #{encoder_forward.1} parent=1 // pred_region
      %s2123 = ssub.s32 32, 32
      %2124 = vsyncadd [#allocation4], %s2123
      %s2126 = sshll.u32 [#allocation8], 4
      %s2127 = int_to_ptr.vmem [resolvable:$true] %s2126
      %2129 = dma.vmem_to_hbm [thread:$0]  %s2127, 32, %s11, [#allocation4]
    $region61: #{encoder_forward.1} parent=1 // pred_fallthru
      _
    // Predicated region
    $region62: #{encoder_forward.1} parent=1 // pred_check
      _
    $region63: #{encoder_forward.1} parent=1 // pred_check_branch
      %2131 = sbr.rel (0) target = $region65
    $region64: #{encoder_forward.1} parent=1 // pred_region
      %2132 = dma.done [#allocation4], 32
    $region65: #{encoder_forward.1} parent=1 // pred_fallthru
      _
    %2133 = vsyncpa [#allocation3], 1
    %2134 = vsyncpa [#allocation6], 1
    %2135 = vsyncpa [#allocation4], 1

</llo_original>
